<compile_context>
chip_gen: v6e
topology: v6e:2x2x1
jax: 0.10.0
libtpu: 0.0.40
codegen_flags: <defaults>
</compile_context>

<pallas_src>
import functools

import jax
import jax.numpy as jnp
from jax import lax
from jax.experimental import pallas as pl
from jax.experimental.pallas import tpu as pltpu

EPS = 1e-5
N_GROUPS = 32


def _vmem_limit_bytes():
    """~75% of physical VMEM, capped at 100 MiB (v5e/v6e ~96 MiB, v7x ~48 MiB)."""
    try:
        cap = int(pltpu.get_tpu_info().vmem_capacity_bytes)
    except Exception:
        return 48 * 1024 * 1024          # safe fallback (known-good)
    return max(32 * 1024 * 1024, min((cap * 3) // 4, 100 * 1024 * 1024))


def _pick_strip_rows(H, W, Cin, Cp, wp):
    """Largest divisor of H (< H, so >= 2 strips) whose per-step blocks fit budget."""
    h_budget = 1 * 1024 * 1024           # f32 h block per strip
    lhs_budget = 8 * 1024 * 1024         # bf16 im2col block per strip
    best = None
    for sh in range(1, H):
        if H % sh or (sh * W) % 8:        # out/h block sublane alignment
            continue
        if sh * W * Cp * 4 > h_budget:
            continue
        if sh * wp * 9 * Cin * 2 > lhs_budget:
            continue
        best = sh
    return best if best is not None else H


def _conv_stats_kernel(x_ref, w_ref, bt_ref, h_ref, st_ref, *, sh, wp, w_real):
    """Pass 1 — one grid step = one (batch, row-strip).

    x_ref : (1, 1, SL, Cin)  bf16 zero-padded input strip, rows flattened;
                             SL = (sh + 3) * wp (2-row conv halo + round-up).
    w_ref : (9*Cin, Cp)      bf16 conv weight, tap-major ((ky*3+kx)*Cin + c).
    bt_ref: (1, 1, Cp)       f32 conv bias + time projection for this batch.
    h_ref : (1, sh*W, Cp)    f32 conv+bias+time strip (input of pass 2).
    st_ref: (1, 1, 2, Cp)    f32 per-strip per-channel [sum, sum of squares].
    """
    L = sh * wp
    # im2col: 9 contiguous flat-row slices concatenated on the lane axis ->
    # one fat K=9*Cin matmul (MXU accumulates internally; no 9-deep VPU chain).
    taps = []
    for dy in range(3):
        for dx in range(3):
            off = dy * wp + dx                       # static offset
            taps.append(x_ref[0, 0, off:off + L, :])  # (L, Cin) bf16
    lhs = jnp.concatenate(taps, axis=1)               # (L, 9*Cin) bf16
    acc = jnp.dot(lhs, w_ref[...], preferred_element_type=jnp.float32)
    h = acc + bt_ref[0]                                # (L, Cp) f32

    # Drop the width-halo columns BEFORE stats and writeback: they hold
    # (bias+time)-only garbage and, for the largest tap offsets, data wrapped
    # from the next row.  Any reduction over `acc`/`h` before this point would
    # silently corrupt the GroupNorm statistics.
    cp = h.shape[-1]
    h = h.reshape(sh, wp, cp)[:, :w_real, :].reshape(sh * w_real, cp)

    h_ref[0] = h
    st = jnp.concatenate([jnp.sum(h, axis=0, keepdims=True),
                          jnp.sum(h * h, axis=0, keepdims=True)], axis=0)
    st_ref[0, 0] = st


def _norm_silu_residual_kernel(h_ref, coef_ref, o_ref, *, approx_sigmoid):
    """Pass 2 — elementwise normalize + SiLU + residual on one strip.

    h_ref   : (1, sh*W, Cp) f32
    coef_ref: (1, 3, Cp)    f32 rows = [gamma*inv, beta - mean*gamma*inv, tproj]
    o_ref   : (1, sh*W, Cp)
    """
    h = h_ref[0]
    gi = coef_ref[0, 0:1, :]
    shift = coef_ref[0, 1:2, :]
    tp = coef_ref[0, 2:3, :]
    gn = h * gi + shift                                 # fused normalize+affine
    # Sigmoid divide on the EUP; approx=True (recommended on v5e) lands the
    # reciprocal on the otherwise-idle EUP slot (~1e-3 rel err inside sigmoid).
    sig = pl.reciprocal(1.0 + jnp.exp(-gn), approx=approx_sigmoid)
    # conv_out is never kept live: conv_out == h - tp (live-set reduction).
    o_ref[0] = (h - tp + gn * sig).astype(o_ref.dtype)


@functools.partial(jax.jit, static_argnames=("out_dtype", "approx_sigmoid"))
def residual_block(x_nchw, t, w_conv, b_conv, w_time, b_time, gamma, beta,
                   out_dtype=jnp.float32, approx_sigmoid=False):
    """x_nchw: (B, Cin, H, W) f32, t: (B, Tdim) f32 -> (B, Cout, H, W)."""
    B, Cin, H, W = x_nchw.shape
    Cout, w_cin, kh, kw = w_conv.shape
    assert (kh, kw) == (3, 3) and w_cin == Cin
    assert Cout % N_GROUPS == 0, "GroupNorm(32) requires Cout % 32 == 0"

    # Lane-dense channel axis: pad Cout < 128 up to a full vreg so epilogue
    # stores are unmasked.  Padded channels carry zeros end-to-end.
    Cp = Cout if Cout >= 128 else 128

    wp = ((W + 2 + 7) // 8) * 8          # padded width incl. halo, sublane mult
    sh = _pick_strip_rows(H, W, Cin, Cp, wp)
    n_strips = H // sh
    SL = (sh + 3) * wp                    # strip rows incl. halo + round-up
    HW = H * W

    # --- wrapper-side layout (one extra HBM pass over x) ----------------------
    # TODO(synk): keep the surrounding model NHWC end-to-end and express the
    # overlapping halo strips with element-offset blocks / manual DMA so this
    # transpose+pad+strip-stack pass disappears.
    x_nhwc = jnp.transpose(x_nchw, (0, 2, 3, 1)).astype(jnp.bfloat16)
    hp = H + 3                            # 1 top + 2 bottom zero rows
    x_pad = jnp.pad(x_nhwc, ((0, 0), (1, hp - H - 1), (1, wp - W - 1), (0, 0)))
    x_flat = x_pad.reshape(B, hp * wp, Cin)
    x_strips = jnp.stack(
        [lax.slice_in_dim(x_flat, s * sh * wp, s * sh * wp + SL, axis=1)
         for s in range(n_strips)], axis=1)           # (B, n_strips, SL, Cin)

    # Conv weight -> (9*Cin, Cp), tap-major, bf16, zero-padded channels.
    wc = jnp.transpose(w_conv, (2, 3, 1, 0)).reshape(9 * Cin, Cout)
    wc = jnp.pad(wc, ((0, 0), (0, Cp - Cout))).astype(jnp.bfloat16)

    # Time projection once for the whole batch; conv bias folded in for pass 1.
    tp = (jnp.dot(t.astype(jnp.float32), w_time.astype(jnp.float32).T,
                  precision=lax.Precision.HIGHEST)
          + b_time.astype(jnp.float32))                # (B, Cout)
    bt = tp + b_conv.astype(jnp.float32)[None, :]
    bt_p = jnp.pad(bt, ((0, 0), (0, Cp - Cout))).reshape(B, 1, Cp)

    vmem_limit = _vmem_limit_bytes()

    # --- pass 1: conv + bias/time add + per-strip channel stats ---------------
    conv_kernel = functools.partial(_conv_stats_kernel, sh=sh, wp=wp, w_real=W)
    h, part = pl.pallas_call(
        conv_kernel,
        out_shape=(jax.ShapeDtypeStruct((B, HW, Cp), jnp.float32),
                   jax.ShapeDtypeStruct((B, n_strips, 2, Cp), jnp.float32)),
        grid_spec=pltpu.PrefetchScalarGridSpec(
            num_scalar_prefetch=0,
            grid=(B, n_strips),
            in_specs=[
                pl.BlockSpec((1, 1, SL, Cin), lambda b, s: (b, s, 0, 0)),
                # TODO(synk): pipeline_mode=pl.Buffered(1) on this invariant
                # weight block (and Buffered(3) on x for v5e/v6e) once the main
                # pallas_call pipeline honors pipeline_mode on this jax version.
                pl.BlockSpec((9 * Cin, Cp), lambda b, s: (0, 0)),
                pl.BlockSpec((1, 1, Cp), lambda b, s: (b, 0, 0)),
            ],
            out_specs=[
                pl.BlockSpec((1, sh * W, Cp), lambda b, s: (b, s, 0)),
                pl.BlockSpec((1, 1, 2, Cp), lambda b, s: (b, s, 0, 0)),
            ]),
        compiler_params=pltpu.CompilerParams(
            dimension_semantics=("parallel", "parallel"),
            vmem_limit_bytes=vmem_limit),
    )(x_strips, wc, bt_p)

    # --- GroupNorm stats across strips (tiny, plain JAX, fuses under jit) -----
    gs = Cout // N_GROUPS
    ssum = jnp.sum(part, axis=1)[:, :, :Cout]            # (B, 2, Cout)
    gsum = ssum.reshape(B, 2, N_GROUPS, gs).sum(axis=-1)  # (B, 2, NG)
    cnt = float(gs * HW)
    mean_g = gsum[:, 0, :] / cnt
    # E[x^2] - mean^2 with a clamp; TODO(synk): switch to a (x-mean)^2 pass if
    # real checkpoints push |mean| >> std beyond f32 cancellation headroom.
    var_g = jnp.maximum(gsum[:, 1, :] / cnt - mean_g * mean_g, 0.0)
    inv_g = lax.rsqrt(var_g + EPS)
    mean_c = jnp.repeat(mean_g, gs, axis=1)               # (B, Cout)
    inv_c = jnp.repeat(inv_g, gs, axis=1)
    gi_c = gamma.astype(jnp.float32)[None, :] * inv_c
    shift_c = beta.astype(jnp.float32)[None, :] - mean_c * gi_c
    pad_c = lambda a: jnp.pad(a, ((0, 0), (0, Cp - Cout)))
    coef = jnp.stack([pad_c(gi_c), pad_c(shift_c), pad_c(tp)], axis=1)  # (B,3,Cp)

    # --- pass 2: normalize + SiLU + residual (pure elementwise strips) --------
    apply_kernel = functools.partial(_norm_silu_residual_kernel,
                                     approx_sigmoid=approx_sigmoid)
    out_p = pl.pallas_call(
        apply_kernel,
        out_shape=jax.ShapeDtypeStruct((B, HW, Cp), out_dtype),
        grid_spec=pltpu.PrefetchScalarGridSpec(
            num_scalar_prefetch=0,
            grid=(B, n_strips),
            in_specs=[
                pl.BlockSpec((1, sh * W, Cp), lambda b, s: (b, s, 0)),
                pl.BlockSpec((1, 3, Cp), lambda b, s: (b, 0, 0)),
            ],
            out_specs=pl.BlockSpec((1, sh * W, Cp), lambda b, s: (b, s, 0)),
        ),
        compiler_params=pltpu.CompilerParams(
            dimension_semantics=("parallel", "parallel"),
            vmem_limit_bytes=vmem_limit),
    )(h, coef)

    out_nhwc = out_p.reshape(B, H, W, Cp)[..., :Cout]
    # NHWC -> NCHW (fuses with downstream consumers under jit).
    return jnp.transpose(out_nhwc, (0, 3, 1, 2))


def _reference(x_nchw, t, w_conv, b_conv, w_time, b_time, gamma, beta):
    """Plain-JAX reference mirroring the PyTorch forward (NCHW).

    Conv inputs are rounded to bf16 (f32 accumulation) to match the kernel's
    MXU precision; everything else is f32.
    """
    conv_out = lax.conv_general_dilated(
        x_nchw.astype(jnp.bfloat16), w_conv.astype(jnp.bfloat16),
        window_strides=(1, 1), padding=((1, 1), (1, 1)),
        dimension_numbers=("NCHW", "OIHW", "NCHW"),
        preferred_element_type=jnp.float32)
    conv_out = conv_out + b_conv.reshape(1, -1, 1, 1)
    t_out = (jnp.dot(t, w_time.T, precision=lax.Precision.HIGHEST)
             + b_time).reshape(t.shape[0], -1, 1, 1)
    h = conv_out + t_out                                   # (B, C, H, W)
    B, C, H, W = h.shape
    hg = h.reshape(B, N_GROUPS, C // N_GROUPS, H, W)
    mean = hg.mean(axis=(2, 3, 4), keepdims=True)
    var = ((hg - mean) ** 2).mean(axis=(2, 3, 4), keepdims=True)
    hn = ((hg - mean) / jnp.sqrt(var + EPS)).reshape(B, C, H, W)
    gn = hn * gamma.reshape(1, -1, 1, 1) + beta.reshape(1, -1, 1, 1)
    silu = gn * jax.nn.sigmoid(gn)
    return conv_out + silu


if __name__ == "__main__":
    B, Cin, Cout, Tdim, H, W = 2, 4, 32, 8, 16, 16

    key = jax.random.PRNGKey(0)
    kx, kt, kwc, kbc, kwt, kbt, kg, kb = jax.random.split(key, 8)

    x = jax.random.normal(kx, (B, Cin, H, W), jnp.float32)
    t = jax.random.normal(kt, (B, Tdim), jnp.float32)

    # Deterministic parameter init (shapes follow the nn.Module __init__).
    w_conv = 0.1 * jax.random.normal(kwc, (Cout, Cin, 3, 3), jnp.float32)
    b_conv = 0.1 * jax.random.normal(kbc, (Cout,), jnp.float32)
    w_time = 0.1 * jax.random.normal(kwt, (Cout, Tdim), jnp.float32)
    b_time = 0.1 * jax.random.normal(kbt, (Cout,), jnp.float32)
    gamma = 1.0 + 0.05 * jax.random.normal(kg, (Cout,), jnp.float32)
    beta = 0.05 * jax.random.normal(kb, (Cout,), jnp.float32)

    out = residual_block(x, t, w_conv, b_conv, w_time, b_time, gamma, beta)
    out = jax.block_until_ready(out)

    ref = _reference(x, t, w_conv, b_conv, w_time, b_time, gamma, beta)
    assert out.shape == (B, Cout, H, W)
    max_err = float(jnp.max(jnp.abs(out - ref)))
    assert jnp.allclose(out, ref, atol=1e-3, rtol=1e-3), max_err

    print("KERNEL_OK")
</pallas_src>

<mosaic_0001>
module attributes {stable_mosaic.version = 11 : i64} {
  func.func @_conv_stats_kernel(%arg0: i32, %arg1: i32, %arg2: memref<1x1x264x4xbf16, #tpu.memory_space<vmem>>, %arg3: memref<36x128xbf16, #tpu.memory_space<vmem>>, %arg4: memref<1x1x128xf32, #tpu.memory_space<vmem>>, %arg5: memref<1x128x128xf32, #tpu.memory_space<vmem>>, %arg6: memref<1x1x2x128xf32, #tpu.memory_space<vmem>>) attributes {dimension_semantics = [#tpu.dimension_semantics<parallel>, #tpu.dimension_semantics<parallel>], iteration_bounds = array<i64: 2, 2>, scalar_prefetch = 0 : i64, scratch_operands = 0 : i64, tpu.core_type = #tpu.core_type<tc>, window_params = [{transform_indices = @transform_0, window_bounds = array<i64: 1, 1, 264, 4>}, {pipeline_mode = #tpu.pipeline_mode<synchronous>, transform_indices = @transform_1, window_bounds = array<i64: 36, 128>}, {transform_indices = @transform_2, window_bounds = array<i64: 1, 1, 128>}, {transform_indices = @transform_3, window_bounds = array<i64: 1, 128, 128>}, {transform_indices = @transform_4, window_bounds = array<i64: 1, 1, 2, 128>}]} {
    %c0 = arith.constant 0 : index
    %c0_0 = arith.constant 0 : index
    %c0_1 = arith.constant 0 : index
    %c0_2 = arith.constant 0 : index
    %0 = vector.load %arg2[%c0, %c0_0, %c0_1, %c0_2] : memref<1x1x264x4xbf16, #tpu.memory_space<vmem>>, vector<1x1x192x4xbf16>
    %1 = vector.shape_cast %0 : vector<1x1x192x4xbf16> to vector<192x4xbf16>
    %c0_3 = arith.constant 0 : index
    %c0_4 = arith.constant 0 : index
    %c1 = arith.constant 1 : index
    %c0_5 = arith.constant 0 : index
    %2 = vector.load %arg2[%c0_3, %c0_4, %c1, %c0_5] : memref<1x1x264x4xbf16, #tpu.memory_space<vmem>>, vector<1x1x192x4xbf16>
    %3 = vector.shape_cast %2 : vector<1x1x192x4xbf16> to vector<192x4xbf16>
    %c0_6 = arith.constant 0 : index
    %c0_7 = arith.constant 0 : index
    %c2 = arith.constant 2 : index
    %c0_8 = arith.constant 0 : index
    %4 = vector.load %arg2[%c0_6, %c0_7, %c2, %c0_8] : memref<1x1x264x4xbf16, #tpu.memory_space<vmem>>, vector<1x1x192x4xbf16>
    %5 = vector.shape_cast %4 : vector<1x1x192x4xbf16> to vector<192x4xbf16>
    %c0_9 = arith.constant 0 : index
    %c0_10 = arith.constant 0 : index
    %c24 = arith.constant 24 : index
    %c0_11 = arith.constant 0 : index
    %6 = vector.load %arg2[%c0_9, %c0_10, %c24, %c0_11] : memref<1x1x264x4xbf16, #tpu.memory_space<vmem>>, vector<1x1x192x4xbf16>
    %7 = vector.shape_cast %6 : vector<1x1x192x4xbf16> to vector<192x4xbf16>
    %c0_12 = arith.constant 0 : index
    %c0_13 = arith.constant 0 : index
    %c25 = arith.constant 25 : index
    %c0_14 = arith.constant 0 : index
    %8 = vector.load %arg2[%c0_12, %c0_13, %c25, %c0_14] : memref<1x1x264x4xbf16, #tpu.memory_space<vmem>>, vector<1x1x192x4xbf16>
    %9 = vector.shape_cast %8 : vector<1x1x192x4xbf16> to vector<192x4xbf16>
    %c0_15 = arith.constant 0 : index
    %c0_16 = arith.constant 0 : index
    %c26 = arith.constant 26 : index
    %c0_17 = arith.constant 0 : index
    %10 = vector.load %arg2[%c0_15, %c0_16, %c26, %c0_17] : memref<1x1x264x4xbf16, #tpu.memory_space<vmem>>, vector<1x1x192x4xbf16>
    %11 = vector.shape_cast %10 : vector<1x1x192x4xbf16> to vector<192x4xbf16>
    %c0_18 = arith.constant 0 : index
    %c0_19 = arith.constant 0 : index
    %c48 = arith.constant 48 : index
    %c0_20 = arith.constant 0 : index
    %12 = vector.load %arg2[%c0_18, %c0_19, %c48, %c0_20] : memref<1x1x264x4xbf16, #tpu.memory_space<vmem>>, vector<1x1x192x4xbf16>
    %13 = vector.shape_cast %12 : vector<1x1x192x4xbf16> to vector<192x4xbf16>
    %c0_21 = arith.constant 0 : index
    %c0_22 = arith.constant 0 : index
    %c49 = arith.constant 49 : index
    %c0_23 = arith.constant 0 : index
    %14 = vector.load %arg2[%c0_21, %c0_22, %c49, %c0_23] : memref<1x1x264x4xbf16, #tpu.memory_space<vmem>>, vector<1x1x192x4xbf16>
    %15 = vector.shape_cast %14 : vector<1x1x192x4xbf16> to vector<192x4xbf16>
    %c0_24 = arith.constant 0 : index
    %c0_25 = arith.constant 0 : index
    %c50 = arith.constant 50 : index
    %c0_26 = arith.constant 0 : index
    %16 = vector.load %arg2[%c0_24, %c0_25, %c50, %c0_26] : memref<1x1x264x4xbf16, #tpu.memory_space<vmem>>, vector<1x1x192x4xbf16>
    %17 = vector.shape_cast %16 : vector<1x1x192x4xbf16> to vector<192x4xbf16>
    %18 = tpu.concatenate %1, %3, %5, %7, %9, %11, %13, %15, %17 in 1 : vector<192x4xbf16>, vector<192x4xbf16>, vector<192x4xbf16>, vector<192x4xbf16>, vector<192x4xbf16>, vector<192x4xbf16>, vector<192x4xbf16>, vector<192x4xbf16>, vector<192x4xbf16> -> vector<192x36xbf16>
    %c0_27 = arith.constant 0 : index
    %c0_28 = arith.constant 0 : index
    %19 = vector.load %arg3[%c0_27, %c0_28] : memref<36x128xbf16, #tpu.memory_space<vmem>>, vector<36x128xbf16>
    %cst = arith.constant dense<0.000000e+00> : vector<192x128xf32>
    %20 = tpu.matmul %18, %19, %cst {dimension_numbers = #tpu.dot_dimension_numbers<[1], [0], [0], [1], [0, 0, 1, 1], [], []>} : vector<192x36xbf16>, vector<36x128xbf16>, vector<192x128xf32> -> vector<192x128xf32>
    %c0_29 = arith.constant 0 : index
    %c0_30 = arith.constant 0 : index
    %c0_31 = arith.constant 0 : index
    %21 = vector.load %arg4[%c0_29, %c0_30, %c0_31] : memref<1x1x128xf32, #tpu.memory_space<vmem>>, vector<1x1x128xf32>
    %22 = vector.shape_cast %21 : vector<1x1x128xf32> to vector<1x128xf32>
    %23 = vector.broadcast %22 : vector<1x128xf32> to vector<192x128xf32>
    %24 = arith.addf %20, %23 : vector<192x128xf32>
    %25 = vector.shape_cast %24 : vector<192x128xf32> to vector<8x24x128xf32>
    %26 = vector.extract_strided_slice %25 {offsets = [0, 0, 0], sizes = [8, 16, 128], strides = [1, 1, 1]} : vector<8x24x128xf32> to vector<8x16x128xf32>
    %27 = vector.shape_cast %26 : vector<8x16x128xf32> to vector<128x128xf32>
    %c0_32 = arith.constant 0 : index
    %c0_33 = arith.constant 0 : index
    %c0_34 = arith.constant 0 : index
    %28 = vector.load %arg5[%c0_32, %c0_33, %c0_34] : memref<1x128x128xf32, #tpu.memory_space<vmem>>, vector<1x128x128xf32>
    %29 = vector.shape_cast %28 : vector<1x128x128xf32> to vector<128x128xf32>
    %30 = vector.shape_cast %27 : vector<128x128xf32> to vector<1x128x128xf32>
    tpu.vector_store %arg5[%c0_32, %c0_33, %c0_34], %30 {strides = array<i32>} : memref<1x128x128xf32, #tpu.memory_space<vmem>>, vector<1x128x128xf32>,
    %cst_35 = arith.constant dense<0.000000e+00> : vector<128xf32>
    %31 = vector.multi_reduction <add>, %27, %cst_35 [0] : vector<128x128xf32> to vector<128xf32>
    %32 = vector.shape_cast %31 : vector<128xf32> to vector<1x128xf32>
    %33 = arith.mulf %27, %27 : vector<128x128xf32>
    %cst_36 = arith.constant dense<0.000000e+00> : vector<128xf32>
    %34 = vector.multi_reduction <add>, %33, %cst_36 [0] : vector<128x128xf32> to vector<128xf32>
    %35 = vector.shape_cast %34 : vector<128xf32> to vector<1x128xf32>
    %36 = tpu.concatenate %32, %35 in 0 : vector<1x128xf32>, vector<1x128xf32> -> vector<2x128xf32>
    %c0_37 = arith.constant 0 : index
    %c0_38 = arith.constant 0 : index
    %c0_39 = arith.constant 0 : index
    %c0_40 = arith.constant 0 : index
    %37 = vector.load %arg6[%c0_37, %c0_38, %c0_39, %c0_40] : memref<1x1x2x128xf32, #tpu.memory_space<vmem>>, vector<1x1x2x128xf32>
    %38 = vector.shape_cast %37 : vector<1x1x2x128xf32> to vector<2x128xf32>
    %39 = vector.shape_cast %36 : vector<2x128xf32> to vector<1x1x2x128xf32>
    tpu.vector_store %arg6[%c0_37, %c0_38, %c0_39, %c0_40], %39 {strides = array<i32>} : memref<1x1x2x128xf32, #tpu.memory_space<vmem>>, vector<1x1x2x128xf32>,
    return
  }
  func.func @transform_0(%arg0: i32, %arg1: i32) -> (i32, i32, i32, i32) {
    %c0_i32 = arith.constant 0 : i32
    %c0_i32_0 = arith.constant 0 : i32
    %c0_i32_1 = arith.constant 0 : i32
    return %arg0, %arg1, %c0_i32, %c0_i32_0 : i32, i32, i32, i32
  }
  func.func @transform_1(%arg0: i32, %arg1: i32) -> (i32, i32) {
    %c0_i32 = arith.constant 0 : i32
    %c0_i32_0 = arith.constant 0 : i32
    %c0_i32_1 = arith.constant 0 : i32
    return %c0_i32, %c0_i32_0 : i32, i32
  }
  func.func @transform_2(%arg0: i32, %arg1: i32) -> (i32, i32, i32) {
    %c0_i32 = arith.constant 0 : i32
    %c0_i32_0 = arith.constant 0 : i32
    %c0_i32_1 = arith.constant 0 : i32
    return %arg0, %c0_i32, %c0_i32_0 : i32, i32, i32
  }
  func.func @transform_3(%arg0: i32, %arg1: i32) -> (i32, i32, i32) {
    %c0_i32 = arith.constant 0 : i32
    %c0_i32_0 = arith.constant 0 : i32
    return %arg0, %arg1, %c0_i32 : i32, i32, i32
  }
  func.func @transform_4(%arg0: i32, %arg1: i32) -> (i32, i32, i32, i32) {
    %c0_i32 = arith.constant 0 : i32
    %c0_i32_0 = arith.constant 0 : i32
    %c0_i32_1 = arith.constant 0 : i32
    return %arg0, %arg1, %c0_i32, %c0_i32_0 : i32, i32, i32, i32
  }
}

module attributes {stable_mosaic.version = 11 : i64} {
  func.func @_norm_silu_residual_kernel(%arg0: i32, %arg1: i32, %arg2: memref<1x128x128xf32, #tpu.memory_space<vmem>>, %arg3: memref<1x3x128xf32, #tpu.memory_space<vmem>>, %arg4: memref<1x128x128xf32, #tpu.memory_space<vmem>>) attributes {dimension_semantics = [#tpu.dimension_semantics<parallel>, #tpu.dimension_semantics<parallel>], iteration_bounds = array<i64: 2, 2>, scalar_prefetch = 0 : i64, scratch_operands = 0 : i64, tpu.core_type = #tpu.core_type<tc>, window_params = [{transform_indices = @transform_0, window_bounds = array<i64: 1, 128, 128>}, {transform_indices = @transform_1, window_bounds = array<i64: 1, 3, 128>}, {transform_indices = @transform_2, window_bounds = array<i64: 1, 128, 128>}]} {
    %c0 = arith.constant 0 : index
    %c0_0 = arith.constant 0 : index
    %c0_1 = arith.constant 0 : index
    %0 = vector.load %arg2[%c0, %c0_0, %c0_1] : memref<1x128x128xf32, #tpu.memory_space<vmem>>, vector<1x128x128xf32>
    %1 = vector.shape_cast %0 : vector<1x128x128xf32> to vector<128x128xf32>
    %c0_2 = arith.constant 0 : index
    %c0_3 = arith.constant 0 : index
    %c0_4 = arith.constant 0 : index
    %2 = vector.load %arg3[%c0_2, %c0_3, %c0_4] : memref<1x3x128xf32, #tpu.memory_space<vmem>>, vector<1x1x128xf32>
    %3 = vector.shape_cast %2 : vector<1x1x128xf32> to vector<1x128xf32>
    %c0_5 = arith.constant 0 : index
    %c1 = arith.constant 1 : index
    %c0_6 = arith.constant 0 : index
    %4 = vector.load %arg3[%c0_5, %c1, %c0_6] : memref<1x3x128xf32, #tpu.memory_space<vmem>>, vector<1x1x128xf32>
    %5 = vector.shape_cast %4 : vector<1x1x128xf32> to vector<1x128xf32>
    %c0_7 = arith.constant 0 : index
    %c2 = arith.constant 2 : index
    %c0_8 = arith.constant 0 : index
    %6 = vector.load %arg3[%c0_7, %c2, %c0_8] : memref<1x3x128xf32, #tpu.memory_space<vmem>>, vector<1x1x128xf32>
    %7 = vector.shape_cast %6 : vector<1x1x128xf32> to vector<1x128xf32>
    %8 = vector.broadcast %3 : vector<1x128xf32> to vector<128x128xf32>
    %9 = arith.mulf %1, %8 : vector<128x128xf32>
    %10 = vector.broadcast %5 : vector<1x128xf32> to vector<128x128xf32>
    %11 = arith.addf %9, %10 : vector<128x128xf32>
    %cst = arith.constant 0.000000e+00 : f32
    %12 = vector.broadcast %cst : f32 to vector<128x128xf32>
    %13 = arith.subf %12, %11 : vector<128x128xf32>
    %14 = math.exp %13 : vector<128x128xf32>
    %cst_9 = arith.constant 1.000000e+00 : f32
    %15 = vector.broadcast %cst_9 : f32 to vector<128x128xf32>
    %16 = arith.addf %15, %14 : vector<128x128xf32>
    %17 = tpu.reciprocal %16 : vector<128x128xf32> -> vector<128x128xf32>
    %18 = vector.broadcast %7 : vector<1x128xf32> to vector<128x128xf32>
    %19 = arith.subf %1, %18 : vector<128x128xf32>
    %20 = arith.mulf %11, %17 : vector<128x128xf32>
    %21 = arith.addf %19, %20 : vector<128x128xf32>
    %c0_10 = arith.constant 0 : index
    %c0_11 = arith.constant 0 : index
    %c0_12 = arith.constant 0 : index
    %22 = vector.load %arg4[%c0_10, %c0_11, %c0_12] : memref<1x128x128xf32, #tpu.memory_space<vmem>>, vector<1x128x128xf32>
    %23 = vector.shape_cast %22 : vector<1x128x128xf32> to vector<128x128xf32>
    %24 = vector.shape_cast %21 : vector<128x128xf32> to vector<1x128x128xf32>
    tpu.vector_store %arg4[%c0_10, %c0_11, %c0_12], %24 {strides = array<i32>} : memref<1x128x128xf32, #tpu.memory_space<vmem>>, vector<1x128x128xf32>,
    return
  }
  func.func @transform_0(%arg0: i32, %arg1: i32) -> (i32, i32, i32) {
    %c0_i32 = arith.constant 0 : i32
    %c0_i32_0 = arith.constant 0 : i32
    return %arg0, %arg1, %c0_i32 : i32, i32, i32
  }
  func.func @transform_1(%arg0: i32, %arg1: i32) -> (i32, i32, i32) {
    %c0_i32 = arith.constant 0 : i32
    %c0_i32_0 = arith.constant 0 : i32
    %c0_i32_1 = arith.constant 0 : i32
    return %arg0, %c0_i32, %c0_i32_0 : i32, i32, i32
  }
  func.func @transform_2(%arg0: i32, %arg1: i32) -> (i32, i32, i32) {
    %c0_i32 = arith.constant 0 : i32
    %c0_i32_0 = arith.constant 0 : i32
    return %arg0, %arg1, %c0_i32 : i32, i32, i32
  }
}

</mosaic_0001>

<llo_original>
// kernel: residual_block.3
$region0: #{residual_block.3}
  #allocation0 [shape = 'u32[]', space=smem, size = 0x4, offset = 0x4, fixed_abs, tag = 'smem constant byte address 0x4 - core index']
  #allocation1 [shape = 'u32[144,128]{1,0:T(1,128)}', space=vmem, size = 0x12000, scoped, tag = 'internal scratch']
  %s0 = inlined_call_operand.vmem [shape: f32[2,256,128], index: 0, kind: input, shape index: {}]
  %s1 = inlined_call_operand.vmem [shape: f32[2,3,128], index: 1, kind: input, shape index: {}]
  %s2 = inlined_call_operand.vmem [shape: f32[2,256,128], index: 2, kind: output, shape index: {}]
  %s3 = sld [smem:[#allocation0]]
  $region41: #{residual_block.3} parent=0
    _
  %s5 = ssub.s32 1, %s3
  %s6 = scalar_select 0, %s5, %s3
  loop: start=0, step=1, limit=6
  $region2: #{residual_block.3} parent=0 // loop_pre_header
    _
  $region3: #{residual_block.3} parent=0 // loop_header
    %s8 = sphi 0, %s12
    %p9 = scmp.ge.s32.totalorder %s8, 6
    %s15 = sphi 0, %s27
    %s16 = sphi 0, %s23
    %s17 = sphi 0, %s15
    %s18 = sphi 0, %s16
    %s19 = sphi 0, %s17
    %s20 = sphi 0, %s18
    %s32 = sphi 0, %s34
    %s35 = sphi 0, %s32
    %s36 = sphi 0, %s35
    %s52 = sphi 0, %s36
    %s58 = sphi 0, %s60
    %s61 = sphi 0, %s58
    %s62 = sphi 0, %s61
    %s78 = sphi 0, %s62
    %s86 = sphi 0, %s88
    %s89 = sphi 0, %s86
    %s90 = sphi 0, %s89
    %s106 = sphi 0, %s90
  $region4: #{residual_block.3} parent=0 // loop_header_branch
    %11 = sbr.rel (%p9) target = $region8
  $region5: #{residual_block.3} parent=0 // loop_body
    %s13 = ssub.s32 %s8, 1
    %s14 = ssub.s32 %s8, 2
    %s21 = sadd.s32 1, %s16
    %p22 = scmp.ge.s32.totalorder %s21, 2
    %s23 = scalar_select %p22, 0, %s21
    %s24 = sadd.s32 1, %s15
    %s25 = scalar_select %p22, %s24, %s15
    %p26 = scmp.ge.s32.totalorder %s25, 2
    %s27 = scalar_select %p26, 0, %s25
    %s28 = ssub.s32 %s15, %s27
    %s29 = ssub.s32 %s16, %s23
    %s30 = sor.u32 %s28, %s29
    %p31 = scmp.eq.s32.totalorder %s30, 0
    %s33 = sadd.s32 %s32, 1
    %s34 = scalar_select %p31, %s32, %s33
    %p37 = pneg %p31
    %p38 = scmp.eq.s32.totalorder %s8, 3
    %p39 = por %p37, %p38
    %p40 = scmp.ne.s32.totalorder %s32, %s35
    %p41 = scmp.eq.s32.totalorder %s8, 0
    %p42 = por %p40, %p41
    %p43 = scmp.ne.s32.totalorder %s32, %s35
    %p44 = scmp.eq.s32.totalorder %s13, 3
    %p45 = por %p43, %p44
    %p46 = scmp.ne.s32.totalorder %s35, %s36
    %p47 = scmp.eq.s32.totalorder %s13, 0
    %p48 = por %p46, %p47
    %p49 = scmp.ne.s32.totalorder %s35, %s36
    %p50 = scmp.eq.s32.totalorder %s14, 3
    %p51 = por %p49, %p50
    %p53 = scmp.ne.s32.totalorder %s36, %s52
    %p54 = scmp.eq.s32.totalorder %s14, 0
    %p55 = por %p53, %p54
    %s56 = ssub.s32 %s15, %s27
    %p57 = scmp.eq.s32.totalorder %s56, 0
    %s59 = sadd.s32 %s58, 1
    %s60 = scalar_select %p57, %s58, %s59
    %p63 = pneg %p57
    %p64 = scmp.eq.s32.totalorder %s8, 3
    %p65 = por %p63, %p64
    %p66 = scmp.ne.s32.totalorder %s58, %s61
    %p67 = scmp.eq.s32.totalorder %s8, 0
    %p68 = por %p66, %p67
    %p69 = scmp.ne.s32.totalorder %s58, %s61
    %p70 = scmp.eq.s32.totalorder %s13, 3
    %p71 = por %p69, %p70
    %p72 = scmp.ne.s32.totalorder %s61, %s62
    %p73 = scmp.eq.s32.totalorder %s13, 0
    %p74 = por %p72, %p73
    %p75 = scmp.ne.s32.totalorder %s61, %s62
    %p76 = scmp.eq.s32.totalorder %s14, 3
    %p77 = por %p75, %p76
    %p79 = scmp.ne.s32.totalorder %s62, %s78
    %p80 = scmp.eq.s32.totalorder %s14, 0
    %p81 = por %p79, %p80
    %s82 = ssub.s32 %s15, %s27
    %s83 = ssub.s32 %s16, %s23
    %s84 = sor.u32 %s82, %s83
    %p85 = scmp.eq.s32.totalorder %s84, 0
    %s87 = sadd.s32 %s86, 1
    %s88 = scalar_select %p85, %s86, %s87
    %p91 = pneg %p85
    %p92 = scmp.eq.s32.totalorder %s8, 3
    %p93 = por %p91, %p92
    %p94 = scmp.ne.s32.totalorder %s86, %s89
    %p95 = scmp.eq.s32.totalorder %s8, 0
    %p96 = por %p94, %p95
    %p97 = scmp.ne.s32.totalorder %s86, %s89
    %p98 = scmp.eq.s32.totalorder %s13, 3
    %p99 = por %p97, %p98
    %p100 = scmp.ne.s32.totalorder %s89, %s90
    %p101 = scmp.eq.s32.totalorder %s13, 0
    %p102 = por %p100, %p101
    %p103 = scmp.ne.s32.totalorder %s89, %s90
    %p104 = scmp.eq.s32.totalorder %s14, 3
    %p105 = por %p103, %p104
    %p107 = scmp.ne.s32.totalorder %s90, %s106
    %p108 = scmp.eq.s32.totalorder %s14, 0
    %p109 = por %p107, %p108
    %p110 = scmp.le.s32.totalorder 1, %s8
    %p111 = scmp.lt.s32.totalorder %s8, 5
    %p112 = pnand %p110, %p111
    %p113 = pneg %p112
    // Predicated region
    $region9: #{residual_block.3} parent=5 // pred_check
      _
    $region10: #{residual_block.3} parent=5 // pred_check_branch
      %115 = sbr.rel (%p112) target = $region12
    $region11: #{residual_block.3} parent=5 // pred_region
      %s116 = ssub.s32 %s8, 1
    $region12: #{residual_block.3} parent=5 // pred_fallthru
      _
    %p117 = scmp.lt.s32.totalorder %s8, 4
    // Predicated region
    $region13: #{residual_block.3} parent=5 // pred_check
      %p118 = pneg %p117
    $region14: #{residual_block.3} parent=5 // pred_check_branch
      %120 = sbr.rel (%p118) target = $region16
    $region15: #{residual_block.3} parent=5 // pred_region
      // Predicated region
      $region17: #{residual_block.3} parent=15 // pred_check
        %p121 = pneg %p42
      $region18: #{residual_block.3} parent=15 // pred_check_branch
        %123 = sbr.rel (%p121) target = $region20
      $region19: #{residual_block.3} parent=15 // pred_region
        %s124 = smul.u32 16, %s16
        %p125 = scmp.lt.s32.totalorder %s15, 1
        %s126 = scalar_select %p125, %s15, 1
        %p127 = scmp.lt.s32.totalorder %s124, 31
        %s128 = scalar_select %p127, %s124, 31
        %s129 = smul.addr %s126, 32
        %s130 = sadd.s32 %s128, %s129
        %s131 = smul.addr %s130, 8
        %s132 = scalar_lea.vmem %s0, %s131
        %s133 = smul.u32 16, %s16
      $region20: #{residual_block.3} parent=15 // pred_fallthru
        _
      // Predicated region
      $region21: #{residual_block.3} parent=15 // pred_check
        %p134 = pneg %p68
      $region22: #{residual_block.3} parent=15 // pred_check_branch
        %136 = sbr.rel (%p134) target = $region24
      $region23: #{residual_block.3} parent=15 // pred_region
        %p137 = scmp.lt.s32.totalorder %s15, 1
        %s138 = scalar_select %p137, %s15, 1
        %s139 = smul.addr %s138, 4
        %s140 = scalar_lea.vmem %s1, %s139
      $region24: #{residual_block.3} parent=15 // pred_fallthru
        _
    $region16: #{residual_block.3} parent=5 // pred_fallthru
      _
    %p141 = scmp.le.s32.totalorder 1, %s8
    %p142 = scmp.lt.s32.totalorder %s8, 5
    %p143 = pnand %p141, %p142
    %p144 = pneg %p143
    // Predicated region
    $region25: #{residual_block.3} parent=5 // pred_check
      _
    $region26: #{residual_block.3} parent=5 // pred_check_branch
      %146 = sbr.rel (%p143) target = $region28
    $region27: #{residual_block.3} parent=5 // pred_region
      %s147 = ssub.s32 %s8, 1
      %s148 = smul.u32 16, %s18
      %p149 = scmp.lt.s32.totalorder %s17, 1
      %s150 = scalar_select %p149, %s17, 1
      %p151 = scmp.lt.s32.totalorder %s148, 31
      %s152 = scalar_select %p151, %s148, 31
      %s153 = smul.addr %s150, 32
      %s154 = sadd.s32 %s152, %s153
      %s155 = smul.addr %s154, 8
      %s156 = scalar_lea.vmem %s0, %s155
      %p157 = pneg %p48
      %p158 = pneg %p45
      %p159 = scmp.lt.s32.totalorder %s17, 1
      %s160 = scalar_select %p159, %s17, 1
      %s161 = smul.addr %s160, 4
      %s162 = scalar_lea.vmem %s1, %s161
      %p163 = pneg %p74
      %p164 = pneg %p71
      %p165 = pneg %p102
      %p166 = pneg %p99
      %s167 = smul.u32 16, %s18
      %p168 = scmp.lt.s32.totalorder %s17, 1
      %s169 = scalar_select %p168, %s17, 1
      %p170 = scmp.lt.s32.totalorder %s167, 31
      %s171 = scalar_select %p170, %s167, 31
      %s172 = smul.addr %s169, 32
      %s173 = sadd.s32 %s171, %s172
      %s174 = smul.addr %s173, 8
      %s175 = scalar_lea.vmem %s2, %s174
      %s176 = smul.u32 16, %s18
      %p177 = scmp.lt.s32.totalorder %s17, 1
      %s178 = scalar_select %p177, %s17, 1
      %p179 = scmp.lt.s32.totalorder %s176, 31
      %s180 = scalar_select %p179, %s176, 31
      %s181 = smul.addr %s178, 32
      %s182 = sadd.s32 %s180, %s181
      %s183 = smul.addr %s182, 8
      %s184 = scalar_lea.vmem %s0, %s183
      %s185 = smul.u32 16, %s18
      %p186 = scmp.lt.s32.totalorder %s17, 1
      %s187 = scalar_select %p186, %s17, 1
      %s188 = smul.addr %s187, 4
      %s189 = scalar_lea.vmem %s1, %s188
      %s190 = smul.u32 16, %s18
      %p191 = scmp.lt.s32.totalorder %s17, 1
      %s192 = scalar_select %p191, %s17, 1
      %p193 = scmp.lt.s32.totalorder %s190, 31
      %s194 = scalar_select %p193, %s190, 31
      %s195 = smul.addr %s192, 32
      %s196 = sadd.s32 %s194, %s195
      %s197 = smul.addr %s196, 8
      %s198 = scalar_lea.vmem %s2, %s197
      %s199 = smul.u32 16, %s18
      %v200 = vld [vmem:[%s184] sm:$0xff]
      %v201 = vld [vmem:[%s184 + $0x8] sm:$0xff]
      %v202 = vld [vmem:[%s184 + $0x10] sm:$0xff]
      %v203 = vld [vmem:[%s184 + $0x18] sm:$0xff]
      %v204 = vld [vmem:[%s184 + $0x20] sm:$0xff]
      %v205 = vld [vmem:[%s184 + $0x28] sm:$0xff]
      %v206 = vld [vmem:[%s184 + $0x30] sm:$0xff]
      %v207 = vld [vmem:[%s184 + $0x38] sm:$0xff]
      %v208 = vld [vmem:[%s184 + $0x40] sm:$0xff]
      %v209 = vld [vmem:[%s184 + $0x48] sm:$0xff]
      %v210 = vld [vmem:[%s184 + $0x50] sm:$0xff]
      %v211 = vld [vmem:[%s184 + $0x58] sm:$0xff]
      %v212 = vld [vmem:[%s184 + $0x60] sm:$0xff]
      %v213 = vld [vmem:[%s184 + $0x68] sm:$0xff]
      %v214 = vld [vmem:[%s184 + $0x70] sm:$0xff]
      %v215 = vld [vmem:[%s184 + $0x78] sm:$0xff]
      %v216 = vld [vmem:[%s189] sm:$0x1]
      %v217 = vld [vmem:[%s189 + $0x1] sm:$0x1]
      %v218 = vld [vmem:[%s189 + $0x2] sm:$0x1]
      %v219 = vlaneseq
      %v220 = vshrl.u32 %v219, 7
      %v221 = vsub.s32 0, %v220
      %v222 = vrot.slane %v216, %v221
      %v223 = vmul.f32 %v200, %v222
      %v224 = vmul.f32 %v201, %v222
      %v225 = vmul.f32 %v202, %v222
      %v226 = vmul.f32 %v203, %v222
      %v227 = vmul.f32 %v204, %v222
      %v228 = vmul.f32 %v205, %v222
      %v229 = vmul.f32 %v206, %v222
      %v230 = vmul.f32 %v207, %v222
      %v231 = vmul.f32 %v208, %v222
      %v232 = vmul.f32 %v209, %v222
      %v233 = vmul.f32 %v210, %v222
      %v234 = vmul.f32 %v211, %v222
      %v235 = vmul.f32 %v212, %v222
      %v236 = vmul.f32 %v213, %v222
      %v237 = vmul.f32 %v214, %v222
      %v238 = vmul.f32 %v215, %v222
      %v239 = vlaneseq
      %v240 = vshrl.u32 %v239, 7
      %v241 = vsub.s32 0, %v240
      %v242 = vrot.slane %v217, %v241
      %v243 = vadd.f32 %v223, %v242
      %v244 = vadd.f32 %v224, %v242
      %v245 = vadd.f32 %v225, %v242
      %v246 = vadd.f32 %v226, %v242
      %v247 = vadd.f32 %v227, %v242
      %v248 = vadd.f32 %v228, %v242
      %v249 = vadd.f32 %v229, %v242
      %v250 = vadd.f32 %v230, %v242
      %v251 = vadd.f32 %v231, %v242
      %v252 = vadd.f32 %v232, %v242
      %v253 = vadd.f32 %v233, %v242
      %v254 = vadd.f32 %v234, %v242
      %v255 = vadd.f32 %v235, %v242
      %v256 = vadd.f32 %v236, %v242
      %v257 = vadd.f32 %v237, %v242
      %v258 = vadd.f32 %v238, %v242
      %v259 = vsub.f32 0.0, %v243
      %v260 = vsub.f32 0.0, %v244
      %v261 = vsub.f32 0.0, %v245
      %v262 = vsub.f32 0.0, %v246
      %v263 = vsub.f32 0.0, %v247
      %v264 = vsub.f32 0.0, %v248
      %v265 = vsub.f32 0.0, %v249
      %v266 = vsub.f32 0.0, %v250
      %v267 = vsub.f32 0.0, %v251
      %v268 = vsub.f32 0.0, %v252
      %v269 = vsub.f32 0.0, %v253
      %v270 = vsub.f32 0.0, %v254
      %v271 = vsub.f32 0.0, %v255
      %v272 = vsub.f32 0.0, %v256
      %v273 = vsub.f32 0.0, %v257
      %v274 = vsub.f32 0.0, %v258
      %v275 = vmul.f32 %v259, 1.442695
      %v276 = vpow.pop %v275
      %v277 = vmul.f32 %v260, 1.442695
      %v278 = vpow.pop %v277
      %v279 = vmul.f32 %v261, 1.442695
      %v280 = vpow.pop %v279
      %v281 = vmul.f32 %v262, 1.442695
      %v282 = vpow.pop %v281
      %v283 = vmul.f32 %v263, 1.442695
      %v284 = vpow.pop %v283
      %v285 = vmul.f32 %v264, 1.442695
      %v286 = vpow.pop %v285
      %v287 = vmul.f32 %v265, 1.442695
      %v288 = vpow.pop %v287
      %v289 = vmul.f32 %v266, 1.442695
      %v290 = vpow.pop %v289
      %v291 = vmul.f32 %v267, 1.442695
      %v292 = vpow.pop %v291
      %v293 = vmul.f32 %v268, 1.442695
      %v294 = vpow.pop %v293
      %v295 = vmul.f32 %v269, 1.442695
      %v296 = vpow.pop %v295
      %v297 = vmul.f32 %v270, 1.442695
      %v298 = vpow.pop %v297
      %v299 = vmul.f32 %v271, 1.442695
      %v300 = vpow.pop %v299
      %v301 = vmul.f32 %v272, 1.442695
      %v302 = vpow.pop %v301
      %v303 = vmul.f32 %v273, 1.442695
      %v304 = vpow.pop %v303
      %v305 = vmul.f32 %v274, 1.442695
      %v306 = vpow.pop %v305
      %v307 = vadd.f32 %v276, 1.0
      %v308 = vadd.f32 %v278, 1.0
      %v309 = vadd.f32 %v280, 1.0
      %v310 = vadd.f32 %v282, 1.0
      %v311 = vadd.f32 %v284, 1.0
      %v312 = vadd.f32 %v286, 1.0
      %v313 = vadd.f32 %v288, 1.0
      %v314 = vadd.f32 %v290, 1.0
      %v315 = vadd.f32 %v292, 1.0
      %v316 = vadd.f32 %v294, 1.0
      %v317 = vadd.f32 %v296, 1.0
      %v318 = vadd.f32 %v298, 1.0
      %v319 = vadd.f32 %v300, 1.0
      %v320 = vadd.f32 %v302, 1.0
      %v321 = vadd.f32 %v304, 1.0
      %v322 = vadd.f32 %v306, 1.0
      %v323 = vrcp.pop %v307
      %v324 = vrcp.pop %v308
      %v325 = vrcp.pop %v309
      %v326 = vrcp.pop %v310
      %v327 = vrcp.pop %v311
      %v328 = vrcp.pop %v312
      %v329 = vrcp.pop %v313
      %v330 = vrcp.pop %v314
      %v331 = vrcp.pop %v315
      %v332 = vrcp.pop %v316
      %v333 = vrcp.pop %v317
      %v334 = vrcp.pop %v318
      %v335 = vrcp.pop %v319
      %v336 = vrcp.pop %v320
      %v337 = vrcp.pop %v321
      %v338 = vrcp.pop %v322
      %v339 = vlaneseq
      %v340 = vshrl.u32 %v339, 7
      %v341 = vsub.s32 0, %v340
      %v342 = vrot.slane %v218, %v341
      %v343 = vsub.f32 %v200, %v342
      %v344 = vsub.f32 %v201, %v342
      %v345 = vsub.f32 %v202, %v342
      %v346 = vsub.f32 %v203, %v342
      %v347 = vsub.f32 %v204, %v342
      %v348 = vsub.f32 %v205, %v342
      %v349 = vsub.f32 %v206, %v342
      %v350 = vsub.f32 %v207, %v342
      %v351 = vsub.f32 %v208, %v342
      %v352 = vsub.f32 %v209, %v342
      %v353 = vsub.f32 %v210, %v342
      %v354 = vsub.f32 %v211, %v342
      %v355 = vsub.f32 %v212, %v342
      %v356 = vsub.f32 %v213, %v342
      %v357 = vsub.f32 %v214, %v342
      %v358 = vsub.f32 %v215, %v342
      %v359 = vmul.f32 %v243, %v323
      %v360 = vmul.f32 %v244, %v324
      %v361 = vmul.f32 %v245, %v325
      %v362 = vmul.f32 %v246, %v326
      %v363 = vmul.f32 %v247, %v327
      %v364 = vmul.f32 %v248, %v328
      %v365 = vmul.f32 %v249, %v329
      %v366 = vmul.f32 %v250, %v330
      %v367 = vmul.f32 %v251, %v331
      %v368 = vmul.f32 %v252, %v332
      %v369 = vmul.f32 %v253, %v333
      %v370 = vmul.f32 %v254, %v334
      %v371 = vmul.f32 %v255, %v335
      %v372 = vmul.f32 %v256, %v336
      %v373 = vmul.f32 %v257, %v337
      %v374 = vmul.f32 %v258, %v338
      %v375 = vadd.f32 %v343, %v359
      %v376 = vadd.f32 %v344, %v360
      %v377 = vadd.f32 %v345, %v361
      %v378 = vadd.f32 %v346, %v362
      %v379 = vadd.f32 %v347, %v363
      %v380 = vadd.f32 %v348, %v364
      %v381 = vadd.f32 %v349, %v365
      %v382 = vadd.f32 %v350, %v366
      %v383 = vadd.f32 %v351, %v367
      %v384 = vadd.f32 %v352, %v368
      %v385 = vadd.f32 %v353, %v369
      %v386 = vadd.f32 %v354, %v370
      %v387 = vadd.f32 %v355, %v371
      %v388 = vadd.f32 %v356, %v372
      %v389 = vadd.f32 %v357, %v373
      %v390 = vadd.f32 %v358, %v374
      %391 = vst [vmem:[%s198] sm:$0xff] %v375
      %392 = vst [vmem:[%s198 + $0x8] sm:$0xff] %v376
      %393 = vst [vmem:[%s198 + $0x10] sm:$0xff] %v377
      %394 = vst [vmem:[%s198 + $0x18] sm:$0xff] %v378
      %395 = vst [vmem:[%s198 + $0x20] sm:$0xff] %v379
      %396 = vst [vmem:[%s198 + $0x28] sm:$0xff] %v380
      %397 = vst [vmem:[%s198 + $0x30] sm:$0xff] %v381
      %398 = vst [vmem:[%s198 + $0x38] sm:$0xff] %v382
      %399 = vst [vmem:[%s198 + $0x40] sm:$0xff] %v383
      %400 = vst [vmem:[%s198 + $0x48] sm:$0xff] %v384
      %401 = vst [vmem:[%s198 + $0x50] sm:$0xff] %v385
      %402 = vst [vmem:[%s198 + $0x58] sm:$0xff] %v386
      %403 = vst [vmem:[%s198 + $0x60] sm:$0xff] %v387
      %404 = vst [vmem:[%s198 + $0x68] sm:$0xff] %v388
      %405 = vst [vmem:[%s198 + $0x70] sm:$0xff] %v389
      %406 = vst [vmem:[%s198 + $0x78] sm:$0xff] %v390
      %s407 = smul.u32 16, %s18
      %p408 = scmp.lt.s32.totalorder %s17, 1
      %s409 = scalar_select %p408, %s17, 1
      %p410 = scmp.lt.s32.totalorder %s407, 31
      %s411 = scalar_select %p410, %s407, 31
      %s412 = smul.addr %s409, 32
      %s413 = sadd.s32 %s411, %s412
      %s414 = smul.addr %s413, 8
      %s415 = scalar_lea.vmem %s2, %s414
      // Predicated region
      $region29: #{residual_block.3} parent=27 // pred_check
        %p416 = pneg %p99
      $region30: #{residual_block.3} parent=27 // pred_check_branch
        %418 = sbr.rel (%p416) target = $region32
      $region31: #{residual_block.3} parent=27 // pred_region
        %s419 = smul.u32 16, %s18
      $region32: #{residual_block.3} parent=27 // pred_fallthru
        _
    $region28: #{residual_block.3} parent=5 // pred_fallthru
      _
    %p420 = scmp.le.s32.totalorder 2, %s8
    // Predicated region
    $region33: #{residual_block.3} parent=5 // pred_check
      %p421 = pneg %p420
    $region34: #{residual_block.3} parent=5 // pred_check_branch
      %423 = sbr.rel (%p421) target = $region36
    $region35: #{residual_block.3} parent=5 // pred_region
      %s424 = ssub.s32 %s8, 2
      // Predicated region
      $region37: #{residual_block.3} parent=35 // pred_check
        %p425 = pneg %p105
      $region38: #{residual_block.3} parent=35 // pred_check_branch
        %427 = sbr.rel (%p425) target = $region40
      $region39: #{residual_block.3} parent=35 // pred_region
        %s428 = smul.u32 16, %s20
        %p429 = scmp.lt.s32.totalorder %s19, 1
        %s430 = scalar_select %p429, %s19, 1
        %p431 = scmp.lt.s32.totalorder %s428, 31
        %s432 = scalar_select %p431, %s428, 31
        %s433 = smul.addr %s430, 32
        %s434 = sadd.s32 %s432, %s433
        %s435 = smul.addr %s434, 8
        %s436 = scalar_lea.vmem %s2, %s435
      $region40: #{residual_block.3} parent=35 // pred_fallthru
        _
    $region36: #{residual_block.3} parent=5 // pred_fallthru
      _
  $region6: #{residual_block.3} parent=0 // loop_footer
    %s12 = sadd.s32 1, %s8
  $region7: #{residual_block.3} parent=0 // loop_footer_branch
    %7 = sbr.rel target = $region3
  $region8: #{residual_block.3} parent=0 // loop_exit
    _

// kernel: residual_block.2
$region0: #{residual_block.2}
  #allocation0 [shape = 'u32[]', space=smem, size = 0x4, offset = 0x4, fixed_abs, tag = 'smem constant byte address 0x4 - core index']
  #allocation1 [shape = 'u32[144,128]{1,0:T(1,128)}', space=vmem, size = 0x12000, scoped, tag = 'internal scratch']
  %s0 = inlined_call_operand.vmem [shape: bf16[2,2,264,4], index: 0, kind: input, shape index: {}]
  %s1 = inlined_call_operand.vmem [shape: bf16[36,128], index: 1, kind: input, shape index: {}]
  %s2 = inlined_call_operand.vmem [shape: f32[2,1,128], index: 2, kind: input, shape index: {}]
  %s3 = inlined_call_operand.vmem [shape: f32[2,256,128], index: 3, kind: output, shape index: {0}]
  %s4 = inlined_call_operand.vmem [shape: f32[2,2,2,128], index: 4, kind: output, shape index: {1}]
  %5 = xla_tuple %s3, %s4
  %s6 = sld [smem:[#allocation0]]
  $region53: #{residual_block.2} parent=0
    _
  %s8 = ssub.s32 1, %s6
  %s9 = scalar_select 0, %s8, %s6
  loop: start=0, step=1, limit=6
  $region2: #{residual_block.2} parent=0 // loop_pre_header
    _
  $region3: #{residual_block.2} parent=0 // loop_header
    %s11 = sphi 0, %s15
    %p12 = scmp.ge.s32.totalorder %s11, 6
    %s18 = sphi 0, %s30
    %s19 = sphi 0, %s26
    %s20 = sphi 0, %s18
    %s21 = sphi 0, %s19
    %s22 = sphi 0, %s20
    %s23 = sphi 0, %s21
    %s35 = sphi 0, %s37
    %s38 = sphi 0, %s35
    %s39 = sphi 0, %s38
    %s55 = sphi 0, %s39
    %s59 = sphi 0, %s59
    %s61 = sphi 0, %s59
    %s62 = sphi 0, %s61
    %s76 = sphi 0, %s62
    %s82 = sphi 0, %s84
    %s85 = sphi 0, %s82
    %s86 = sphi 0, %s85
    %s102 = sphi 0, %s86
    %s110 = sphi 0, %s112
    %s113 = sphi 0, %s110
    %s114 = sphi 0, %s113
    %s130 = sphi 0, %s114
    %s138 = sphi 0, %s140
    %s141 = sphi 0, %s138
    %s142 = sphi 0, %s141
    %s158 = sphi 0, %s142
  $region4: #{residual_block.2} parent=0 // loop_header_branch
    %14 = sbr.rel (%p12) target = $region8
  $region5: #{residual_block.2} parent=0 // loop_body
    %s16 = ssub.s32 %s11, 1
    %s17 = ssub.s32 %s11, 2
    %s24 = sadd.s32 1, %s19
    %p25 = scmp.ge.s32.totalorder %s24, 2
    %s26 = scalar_select %p25, 0, %s24
    %s27 = sadd.s32 1, %s18
    %s28 = scalar_select %p25, %s27, %s18
    %p29 = scmp.ge.s32.totalorder %s28, 2
    %s30 = scalar_select %p29, 0, %s28
    %s31 = ssub.s32 %s18, %s30
    %s32 = ssub.s32 %s19, %s26
    %s33 = sor.u32 %s31, %s32
    %p34 = scmp.eq.s32.totalorder %s33, 0
    %s36 = sadd.s32 %s35, 1
    %s37 = scalar_select %p34, %s35, %s36
    %p40 = pneg %p34
    %p41 = scmp.eq.s32.totalorder %s11, 3
    %p42 = por %p40, %p41
    %p43 = scmp.ne.s32.totalorder %s35, %s38
    %p44 = scmp.eq.s32.totalorder %s11, 0
    %p45 = por %p43, %p44
    %p46 = scmp.ne.s32.totalorder %s35, %s38
    %p47 = scmp.eq.s32.totalorder %s16, 3
    %p48 = por %p46, %p47
    %p49 = scmp.ne.s32.totalorder %s38, %s39
    %p50 = scmp.eq.s32.totalorder %s16, 0
    %p51 = por %p49, %p50
    %p52 = scmp.ne.s32.totalorder %s38, %s39
    %p53 = scmp.eq.s32.totalorder %s17, 3
    %p54 = por %p52, %p53
    %p56 = scmp.ne.s32.totalorder %s39, %s55
    %p57 = scmp.eq.s32.totalorder %s17, 0
    %p58 = por %p56, %p57
    %s60 = sadd.s32 %s59, 1
    %p63 = scmp.eq.s32.totalorder %s11, 3
    %p64 = scmp.ne.s32.totalorder %s59, %s61
    %p65 = scmp.eq.s32.totalorder %s11, 0
    %p66 = por %p64, %p65
    %p67 = scmp.ne.s32.totalorder %s59, %s61
    %p68 = scmp.eq.s32.totalorder %s16, 3
    %p69 = por %p67, %p68
    %p70 = scmp.ne.s32.totalorder %s61, %s62
    %p71 = scmp.eq.s32.totalorder %s16, 0
    %p72 = por %p70, %p71
    %p73 = scmp.ne.s32.totalorder %s61, %s62
    %p74 = scmp.eq.s32.totalorder %s17, 3
    %p75 = por %p73, %p74
    %p77 = scmp.ne.s32.totalorder %s62, %s76
    %p78 = scmp.eq.s32.totalorder %s17, 0
    %p79 = por %p77, %p78
    %s80 = ssub.s32 %s18, %s30
    %p81 = scmp.eq.s32.totalorder %s80, 0
    %s83 = sadd.s32 %s82, 1
    %s84 = scalar_select %p81, %s82, %s83
    %p87 = pneg %p81
    %p88 = scmp.eq.s32.totalorder %s11, 3
    %p89 = por %p87, %p88
    %p90 = scmp.ne.s32.totalorder %s82, %s85
    %p91 = scmp.eq.s32.totalorder %s11, 0
    %p92 = por %p90, %p91
    %p93 = scmp.ne.s32.totalorder %s82, %s85
    %p94 = scmp.eq.s32.totalorder %s16, 3
    %p95 = por %p93, %p94
    %p96 = scmp.ne.s32.totalorder %s85, %s86
    %p97 = scmp.eq.s32.totalorder %s16, 0
    %p98 = por %p96, %p97
    %p99 = scmp.ne.s32.totalorder %s85, %s86
    %p100 = scmp.eq.s32.totalorder %s17, 3
    %p101 = por %p99, %p100
    %p103 = scmp.ne.s32.totalorder %s86, %s102
    %p104 = scmp.eq.s32.totalorder %s17, 0
    %p105 = por %p103, %p104
    %s106 = ssub.s32 %s18, %s30
    %s107 = ssub.s32 %s19, %s26
    %s108 = sor.u32 %s106, %s107
    %p109 = scmp.eq.s32.totalorder %s108, 0
    %s111 = sadd.s32 %s110, 1
    %s112 = scalar_select %p109, %s110, %s111
    %p115 = pneg %p109
    %p116 = scmp.eq.s32.totalorder %s11, 3
    %p117 = por %p115, %p116
    %p118 = scmp.ne.s32.totalorder %s110, %s113
    %p119 = scmp.eq.s32.totalorder %s11, 0
    %p120 = por %p118, %p119
    %p121 = scmp.ne.s32.totalorder %s110, %s113
    %p122 = scmp.eq.s32.totalorder %s16, 3
    %p123 = por %p121, %p122
    %p124 = scmp.ne.s32.totalorder %s113, %s114
    %p125 = scmp.eq.s32.totalorder %s16, 0
    %p126 = por %p124, %p125
    %p127 = scmp.ne.s32.totalorder %s113, %s114
    %p128 = scmp.eq.s32.totalorder %s17, 3
    %p129 = por %p127, %p128
    %p131 = scmp.ne.s32.totalorder %s114, %s130
    %p132 = scmp.eq.s32.totalorder %s17, 0
    %p133 = por %p131, %p132
    %s134 = ssub.s32 %s18, %s30
    %s135 = ssub.s32 %s19, %s26
    %s136 = sor.u32 %s134, %s135
    %p137 = scmp.eq.s32.totalorder %s136, 0
    %s139 = sadd.s32 %s138, 1
    %s140 = scalar_select %p137, %s138, %s139
    %p143 = pneg %p137
    %p144 = scmp.eq.s32.totalorder %s11, 3
    %p145 = por %p143, %p144
    %p146 = scmp.ne.s32.totalorder %s138, %s141
    %p147 = scmp.eq.s32.totalorder %s11, 0
    %p148 = por %p146, %p147
    %p149 = scmp.ne.s32.totalorder %s138, %s141
    %p150 = scmp.eq.s32.totalorder %s16, 3
    %p151 = por %p149, %p150
    %p152 = scmp.ne.s32.totalorder %s141, %s142
    %p153 = scmp.eq.s32.totalorder %s16, 0
    %p154 = por %p152, %p153
    %p155 = scmp.ne.s32.totalorder %s141, %s142
    %p156 = scmp.eq.s32.totalorder %s17, 3
    %p157 = por %p155, %p156
    %p159 = scmp.ne.s32.totalorder %s142, %s158
    %p160 = scmp.eq.s32.totalorder %s17, 0
    %p161 = por %p159, %p160
    %p162 = scmp.le.s32.totalorder 1, %s11
    %p163 = scmp.lt.s32.totalorder %s11, 5
    %p164 = pnand %p162, %p163
    %p165 = pneg %p164
    // Predicated region
    $region9: #{residual_block.2} parent=5 // pred_check
      _
    $region10: #{residual_block.2} parent=5 // pred_check_branch
      %167 = sbr.rel (%p164) target = $region12
    $region11: #{residual_block.2} parent=5 // pred_region
      %s168 = ssub.s32 %s11, 1
      // Predicated region
      $region13: #{residual_block.2} parent=11 // pred_check
        %p169 = pneg %p72
      $region14: #{residual_block.2} parent=11 // pred_check_branch
        %171 = sbr.rel (%p169) target = $region16
      $region15: #{residual_block.2} parent=11 // pred_region
        _
      $region16: #{residual_block.2} parent=11 // pred_fallthru
        _
    $region12: #{residual_block.2} parent=5 // pred_fallthru
      _
    %p172 = scmp.lt.s32.totalorder %s11, 4
    // Predicated region
    $region17: #{residual_block.2} parent=5 // pred_check
      %p173 = pneg %p172
    $region18: #{residual_block.2} parent=5 // pred_check_branch
      %175 = sbr.rel (%p173) target = $region20
    $region19: #{residual_block.2} parent=5 // pred_region
      // Predicated region
      $region21: #{residual_block.2} parent=19 // pred_check
        %p176 = pneg %p45
      $region22: #{residual_block.2} parent=19 // pred_check_branch
        %178 = sbr.rel (%p176) target = $region24
      $region23: #{residual_block.2} parent=19 // pred_region
        %p179 = scmp.lt.s32.totalorder %s18, 1
        %s180 = scalar_select %p179, %s18, 1
        %p181 = scmp.lt.s32.totalorder %s19, 1
        %s182 = scalar_select %p181, %s19, 1
        %s183 = smul.addr %s182, 33
        %s184 = smul.addr %s180, 66
        %s185 = sadd.s32 %s183, %s184
        %s186 = smul.addr %s185, 4
        %s187 = scalar_lea.vmem %s0, %s186
      $region24: #{residual_block.2} parent=19 // pred_fallthru
        _
      // Predicated region
      $region25: #{residual_block.2} parent=19 // pred_check
        %p188 = pneg %p92
      $region26: #{residual_block.2} parent=19 // pred_check_branch
        %190 = sbr.rel (%p188) target = $region28
      $region27: #{residual_block.2} parent=19 // pred_region
        %p191 = scmp.lt.s32.totalorder %s18, 1
        %s192 = scalar_select %p191, %s18, 1
        %s193 = scalar_lea.vmem %s2, %s192
      $region28: #{residual_block.2} parent=19 // pred_fallthru
        _
    $region20: #{residual_block.2} parent=5 // pred_fallthru
      _
    %p194 = scmp.le.s32.totalorder 1, %s11
    %p195 = scmp.lt.s32.totalorder %s11, 5
    %p196 = pnand %p194, %p195
    %p197 = pneg %p196
    // Predicated region
    $region29: #{residual_block.2} parent=5 // pred_check
      _
    $region30: #{residual_block.2} parent=5 // pred_check_branch
      %199 = sbr.rel (%p196) target = $region32
    $region31: #{residual_block.2} parent=5 // pred_region
      %s200 = ssub.s32 %s11, 1
      %p201 = scmp.lt.s32.totalorder %s20, 1
      %s202 = scalar_select %p201, %s20, 1
      %p203 = scmp.lt.s32.totalorder %s21, 1
      %s204 = scalar_select %p203, %s21, 1
      %s205 = smul.addr %s204, 33
      %s206 = smul.addr %s202, 66
      %s207 = sadd.s32 %s205, %s206
      %s208 = smul.addr %s207, 4
      %s209 = scalar_lea.vmem %s0, %s208
      %p210 = pneg %p51
      %p211 = pneg %p48
      %p212 = pneg %p72
      %p213 = pneg %p69
      %p214 = scmp.lt.s32.totalorder %s20, 1
      %s215 = scalar_select %p214, %s20, 1
      %s216 = scalar_lea.vmem %s2, %s215
      %p217 = pneg %p98
      %p218 = pneg %p95
      %p219 = pneg %p126
      %p220 = pneg %p123
      %s221 = smul.u32 16, %s21
      %p222 = scmp.lt.s32.totalorder %s20, 1
      %s223 = scalar_select %p222, %s20, 1
      %p224 = scmp.lt.s32.totalorder %s221, 31
      %s225 = scalar_select %p224, %s221, 31
      %s226 = smul.addr %s223, 32
      %s227 = sadd.s32 %s225, %s226
      %s228 = smul.addr %s227, 8
      %s229 = scalar_lea.vmem %s3, %s228
      %p230 = pneg %p154
      %p231 = pneg %p151
      %p232 = scmp.lt.s32.totalorder %s20, 1
      %s233 = scalar_select %p232, %s20, 1
      %p234 = scmp.lt.s32.totalorder %s21, 1
      %s235 = scalar_select %p234, %s21, 1
      %s236 = smul.addr %s233, 2
      %s237 = sadd.s32 %s235, %s236
      %s238 = smul.addr %s237, 2
      %s239 = scalar_lea.vmem %s4, %s238
      %p240 = scmp.lt.s32.totalorder %s20, 1
      %s241 = scalar_select %p240, %s20, 1
      %p242 = scmp.lt.s32.totalorder %s21, 1
      %s243 = scalar_select %p242, %s21, 1
      %s244 = smul.addr %s243, 33
      %s245 = smul.addr %s241, 66
      %s246 = sadd.s32 %s244, %s245
      %s247 = smul.addr %s246, 4
      %s248 = scalar_lea.vmem %s0, %s247
      %p249 = scmp.lt.s32.totalorder %s20, 1
      %s250 = scalar_select %p249, %s20, 1
      %s251 = scalar_lea.vmem %s2, %s250
      %s252 = smul.u32 16, %s21
      %p253 = scmp.lt.s32.totalorder %s20, 1
      %s254 = scalar_select %p253, %s20, 1
      %p255 = scmp.lt.s32.totalorder %s252, 31
      %s256 = scalar_select %p255, %s252, 31
      %s257 = smul.addr %s254, 32
      %s258 = sadd.s32 %s256, %s257
      %s259 = smul.addr %s258, 8
      %s260 = scalar_lea.vmem %s3, %s259
      %s261 = smul.u32 16, %s21
      %p262 = scmp.lt.s32.totalorder %s20, 1
      %s263 = scalar_select %p262, %s20, 1
      %p264 = scmp.lt.s32.totalorder %s21, 1
      %s265 = scalar_select %p264, %s21, 1
      %s266 = smul.addr %s263, 2
      %s267 = sadd.s32 %s265, %s266
      %s268 = smul.addr %s267, 2
      %s269 = scalar_lea.vmem %s4, %s268
      %v271 = vld [vmem:[%s248] sm:$0xf]
      %v272 = vld [vmem:[%s248 + $0x4] sm:$0xf]
      %v273 = vld [vmem:[%s248 + $0x8] sm:$0xf]
      %v274 = vld [vmem:[%s248 + $0xc] sm:$0xf]
      %v275 = vld [vmem:[%s248 + $0x10] sm:$0xf]
      %v276 = vld [vmem:[%s248 + $0x14] sm:$0xf]
      %v277 = vld [vmem:[%s248 + $0x18] sm:$0xf]
      %v278 = vld [vmem:[%s248 + $0x1c] sm:$0xf]
      %v279 = vld [vmem:[%s248 + $0x20] sm:$0xf]
      %v280 = vld [vmem:[%s248 + $0x24] sm:$0xf]
      %v281 = vld [vmem:[%s248 + $0x28] sm:$0xf]
      %v282 = vld [vmem:[%s248 + $0x2c] sm:$0xf]
      %v283 = vld [vmem:[%s248 + $0x30] sm:$0xf]
      %v284 = vld [vmem:[%s248 + $0x34] sm:$0xf]
      %v285 = vld [vmem:[%s248 + $0x38] sm:$0xf]
      %v286 = vld [vmem:[%s248 + $0x3c] sm:$0xf]
      %v287 = vld [vmem:[%s248 + $0x40] sm:$0xf]
      %v288 = vld [vmem:[%s248 + $0x44] sm:$0xf]
      %v289 = vld [vmem:[%s248 + $0x48] sm:$0xf]
      %v290 = vld [vmem:[%s248 + $0x4c] sm:$0xf]
      %v291 = vld [vmem:[%s248 + $0x50] sm:$0xf]
      %v292 = vld [vmem:[%s248 + $0x54] sm:$0xf]
      %v293 = vld [vmem:[%s248 + $0x58] sm:$0xf]
      %v294 = vld [vmem:[%s248 + $0x5c] sm:$0xf]
      %v295 = vld [vmem:[%s248 + $0x60] sm:$0x1]
      %v296 = vld [vmem:[%s248] sm:$0xe]
      %v297 = vld [vmem:[%s248 + $0x60] sm:$0xf]
      %v298 = vld [vmem:[%s248 + $0x64] sm:$0xf]
      %v299 = vld [vmem:[%s248 + $0x68] sm:$0xf]
      %v300 = vld [vmem:[%s248 + $0x6c] sm:$0x1]
      %v301 = vld [vmem:[%s248 + $0xc] sm:$0xe]
      %v302 = vld [vmem:[%s248 + $0x6c] sm:$0xf]
      %v303 = vld [vmem:[%s248 + $0x70] sm:$0xf]
      %v304 = vld [vmem:[%s248 + $0x74] sm:$0xf]
      %v305 = vld [vmem:[%s248 + $0x78] sm:$0x1]
      %v306 = vld [vmem:[%s248 + $0x18] sm:$0xe]
      %v331 = vunpack.c.l.b16 %v271
      %v332 = vunpack.c.l.b16 %v272
      %v333 = vunpack.c.l.b16 %v273
      %v334 = vunpack.c.l.b16 %v274
      %v335 = vunpack.c.l.b16 %v275
      %v336 = vunpack.c.l.b16 %v276
      %v337 = vunpack.c.l.b16 %v277
      %v338 = vunpack.c.l.b16 %v278
      %v339 = vunpack.c.l.b16 %v279
      %v340 = vunpack.c.l.b16 %v280
      %v341 = vunpack.c.l.b16 %v281
      %v342 = vunpack.c.l.b16 %v282
      %v343 = vunpack.c.l.b16 %v283
      %v344 = vunpack.c.l.b16 %v284
      %v345 = vunpack.c.l.b16 %v285
      %v346 = vunpack.c.l.b16 %v286
      %v347 = vunpack.c.l.b16 %v287
      %v348 = vunpack.c.l.b16 %v288
      %v349 = vunpack.c.l.b16 %v289
      %v350 = vunpack.c.l.b16 %v290
      %v351 = vunpack.c.l.b16 %v291
      %v352 = vunpack.c.l.b16 %v292
      %v353 = vunpack.c.l.b16 %v293
      %v354 = vunpack.c.l.b16 %v294
      %v355 = vpack.c.b16 %v332, %v331
      %v356 = vpack.c.b16 %v334, %v333
      %v357 = vpack.c.b16 %v336, %v335
      %v358 = vpack.c.b16 %v338, %v337
      %v359 = vpack.c.b16 %v340, %v339
      %v360 = vpack.c.b16 %v342, %v341
      %v361 = vpack.c.b16 %v344, %v343
      %v362 = vpack.c.b16 %v346, %v345
      %v363 = vpack.c.b16 %v348, %v347
      %v364 = vpack.c.b16 %v350, %v349
      %v365 = vpack.c.b16 %v352, %v351
      %v366 = vpack.c.b16 %v354, %v353
      %v368 = vunpack.c.l.b16 %v295
      %v369 = vpack.c.b16 %v368, %v368
      %vm370 = vsmask.f32 7424
      %v372 = vshrl.u32 %v355, 16
      %v374 = vshll.u32 %v355, 16
      %v376 = vrot.slane %v374, 1
      %v377 = vor.u32 %v372, %v376
      %v379 = vshll.u32 %v356, 16
      %v381 = vrot.slane %v379, 1
      %v382 = vsel %vm370, %v377, %v381
      %v383 = vshrl.u32 %v356, 16
      %v385 = vor.u32 %v383, %v381
      %v387 = vshll.u32 %v357, 16
      %v389 = vrot.slane %v387, 1
      %v390 = vsel %vm370, %v385, %v389
      %v391 = vshrl.u32 %v357, 16
      %v393 = vor.u32 %v391, %v389
      %v395 = vshll.u32 %v358, 16
      %v397 = vrot.slane %v395, 1
      %v398 = vsel %vm370, %v393, %v397
      %v399 = vshrl.u32 %v358, 16
      %v401 = vor.u32 %v399, %v397
      %v403 = vshll.u32 %v359, 16
      %v405 = vrot.slane %v403, 1
      %v406 = vsel %vm370, %v401, %v405
      %v407 = vshrl.u32 %v359, 16
      %v409 = vor.u32 %v407, %v405
      %v411 = vshll.u32 %v360, 16
      %v413 = vrot.slane %v411, 1
      %v414 = vsel %vm370, %v409, %v413
      %v415 = vshrl.u32 %v360, 16
      %v417 = vor.u32 %v415, %v413
      %v419 = vshll.u32 %v361, 16
      %v421 = vrot.slane %v419, 1
      %v422 = vsel %vm370, %v417, %v421
      %v423 = vshrl.u32 %v361, 16
      %v425 = vor.u32 %v423, %v421
      %v427 = vshll.u32 %v362, 16
      %v429 = vrot.slane %v427, 1
      %v430 = vsel %vm370, %v425, %v429
      %v431 = vshrl.u32 %v362, 16
      %v433 = vor.u32 %v431, %v429
      %v435 = vshll.u32 %v363, 16
      %v437 = vrot.slane %v435, 1
      %v438 = vsel %vm370, %v433, %v437
      %v439 = vshrl.u32 %v363, 16
      %v441 = vor.u32 %v439, %v437
      %v443 = vshll.u32 %v364, 16
      %v445 = vrot.slane %v443, 1
      %v446 = vsel %vm370, %v441, %v445
      %v447 = vshrl.u32 %v364, 16
      %v449 = vor.u32 %v447, %v445
      %v451 = vshll.u32 %v365, 16
      %v453 = vrot.slane %v451, 1
      %v454 = vsel %vm370, %v449, %v453
      %v455 = vshrl.u32 %v365, 16
      %v457 = vor.u32 %v455, %v453
      %v459 = vshll.u32 %v366, 16
      %v461 = vrot.slane %v459, 1
      %v462 = vsel %vm370, %v457, %v461
      %v463 = vshrl.u32 %v366, 16
      %v465 = vor.u32 %v463, %v461
      %v467 = vshll.u32 %v369, 16
      %v469 = vrot.slane %v467, 1
      %v470 = vsel %vm370, %v465, %v469
      %471 = vrot.lane.b32.xlu0 %v382, 4
      %v472 = vpop.permute.xlu0 %471
      %473 = vrot.lane.b32.xlu0 %v390, 4
      %v474 = vpop.permute.xlu0 %473
      %475 = vrot.lane.b32.xlu0 %v398, 4
      %v476 = vpop.permute.xlu0 %475
      %477 = vrot.lane.b32.xlu0 %v406, 4
      %v478 = vpop.permute.xlu0 %477
      %479 = vrot.lane.b32.xlu0 %v414, 4
      %v480 = vpop.permute.xlu0 %479
      %481 = vrot.lane.b32.xlu0 %v422, 4
      %v482 = vpop.permute.xlu0 %481
      %483 = vrot.lane.b32.xlu0 %v430, 4
      %v484 = vpop.permute.xlu0 %483
      %485 = vrot.lane.b32.xlu0 %v438, 4
      %v486 = vpop.permute.xlu0 %485
      %487 = vrot.lane.b32.xlu0 %v446, 4
      %v488 = vpop.permute.xlu0 %487
      %489 = vrot.lane.b32.xlu0 %v454, 4
      %v490 = vpop.permute.xlu0 %489
      %491 = vrot.lane.b32.xlu0 %v462, 4
      %v492 = vpop.permute.xlu0 %491
      %493 = vrot.lane.b32.xlu0 %v470, 4
      %v494 = vpop.permute.xlu0 %493
      %v496 = vunpack.c.l.b16 %v296
      %v497 = vpack.c.b16 %v332, %v496
      %vm498 = vcmask 1046528
      %v499 = vrot.slane %v497, 1
      %v500 = vrot.slane %v356, 1
      %v501 = vsel %vm498, %v499, %v500
      %v502 = vrot.slane %v357, 1
      %v503 = vsel %vm498, %v500, %v502
      %v504 = vrot.slane %v358, 1
      %v505 = vsel %vm498, %v502, %v504
      %v506 = vrot.slane %v359, 1
      %v507 = vsel %vm498, %v504, %v506
      %v508 = vrot.slane %v360, 1
      %v509 = vsel %vm498, %v506, %v508
      %v510 = vrot.slane %v361, 1
      %v511 = vsel %vm498, %v508, %v510
      %v512 = vrot.slane %v362, 1
      %v513 = vsel %vm498, %v510, %v512
      %v514 = vrot.slane %v363, 1
      %v515 = vsel %vm498, %v512, %v514
      %v516 = vrot.slane %v364, 1
      %v517 = vsel %vm498, %v514, %v516
      %v518 = vrot.slane %v365, 1
      %v519 = vsel %vm498, %v516, %v518
      %v520 = vrot.slane %v366, 1
      %v521 = vsel %vm498, %v518, %v520
      %v522 = vrot.slane %v369, 1
      %v523 = vsel %vm498, %v520, %v522
      %524 = vrot.lane.b32.xlu0 %v501, 8
      %v525 = vpop.permute.xlu0 %524
      %526 = vrot.lane.b32.xlu0 %v503, 8
      %v527 = vpop.permute.xlu0 %526
      %528 = vrot.lane.b32.xlu0 %v505, 8
      %v529 = vpop.permute.xlu0 %528
      %530 = vrot.lane.b32.xlu0 %v507, 8
      %v531 = vpop.permute.xlu0 %530
      %532 = vrot.lane.b32.xlu0 %v509, 8
      %v533 = vpop.permute.xlu0 %532
      %534 = vrot.lane.b32.xlu0 %v511, 8
      %v535 = vpop.permute.xlu0 %534
      %536 = vrot.lane.b32.xlu0 %v513, 8
      %v537 = vpop.permute.xlu0 %536
      %538 = vrot.lane.b32.xlu0 %v515, 8
      %v539 = vpop.permute.xlu0 %538
      %540 = vrot.lane.b32.xlu0 %v517, 8
      %v541 = vpop.permute.xlu0 %540
      %542 = vrot.lane.b32.xlu0 %v519, 8
      %v543 = vpop.permute.xlu0 %542
      %544 = vrot.lane.b32.xlu0 %v521, 8
      %v545 = vpop.permute.xlu0 %544
      %546 = vrot.lane.b32.xlu0 %v523, 8
      %v547 = vpop.permute.xlu0 %546
      %v551 = vunpack.c.l.b16 %v297
      %v552 = vunpack.c.l.b16 %v298
      %v553 = vunpack.c.l.b16 %v299
      %v554 = vpack.c.b16 %v335, %v334
      %v555 = vpack.c.b16 %v337, %v336
      %v556 = vpack.c.b16 %v339, %v338
      %v557 = vpack.c.b16 %v341, %v340
      %v558 = vpack.c.b16 %v343, %v342
      %v559 = vpack.c.b16 %v345, %v344
      %v560 = vpack.c.b16 %v347, %v346
      %v561 = vpack.c.b16 %v349, %v348
      %v562 = vpack.c.b16 %v351, %v350
      %v563 = vpack.c.b16 %v353, %v352
      %v564 = vpack.c.b16 %v551, %v354
      %v565 = vpack.c.b16 %v553, %v552
      %566 = vrot.lane.b32.xlu0 %v554, 12
      %v567 = vpop.permute.xlu0 %566
      %568 = vrot.lane.b32.xlu0 %v555, 12
      %v569 = vpop.permute.xlu0 %568
      %570 = vrot.lane.b32.xlu0 %v556, 12
      %v571 = vpop.permute.xlu0 %570
      %572 = vrot.lane.b32.xlu0 %v557, 12
      %v573 = vpop.permute.xlu0 %572
      %574 = vrot.lane.b32.xlu0 %v558, 12
      %v575 = vpop.permute.xlu0 %574
      %576 = vrot.lane.b32.xlu0 %v559, 12
      %v577 = vpop.permute.xlu0 %576
      %578 = vrot.lane.b32.xlu0 %v560, 12
      %v579 = vpop.permute.xlu0 %578
      %580 = vrot.lane.b32.xlu0 %v561, 12
      %v581 = vpop.permute.xlu0 %580
      %582 = vrot.lane.b32.xlu0 %v562, 12
      %v583 = vpop.permute.xlu0 %582
      %584 = vrot.lane.b32.xlu0 %v563, 12
      %v585 = vpop.permute.xlu0 %584
      %586 = vrot.lane.b32.xlu0 %v564, 12
      %v587 = vpop.permute.xlu0 %586
      %588 = vrot.lane.b32.xlu0 %v565, 12
      %v589 = vpop.permute.xlu0 %588
      %v591 = vunpack.c.l.b16 %v300
      %v592 = vpack.c.b16 %v591, %v591
      %v594 = vshrl.u32 %v554, 16
      %v596 = vshll.u32 %v554, 16
      %v598 = vrot.slane %v596, 1
      %v599 = vor.u32 %v594, %v598
      %v601 = vshll.u32 %v555, 16
      %v603 = vrot.slane %v601, 1
      %v604 = vsel %vm370, %v599, %v603
      %v605 = vshrl.u32 %v555, 16
      %v607 = vor.u32 %v605, %v603
      %v609 = vshll.u32 %v556, 16
      %v611 = vrot.slane %v609, 1
      %v612 = vsel %vm370, %v607, %v611
      %v613 = vshrl.u32 %v556, 16
      %v615 = vor.u32 %v613, %v611
      %v617 = vshll.u32 %v557, 16
      %v619 = vrot.slane %v617, 1
      %v620 = vsel %vm370, %v615, %v619
      %v621 = vshrl.u32 %v557, 16
      %v623 = vor.u32 %v621, %v619
      %v625 = vshll.u32 %v558, 16
      %v627 = vrot.slane %v625, 1
      %v628 = vsel %vm370, %v623, %v627
      %v629 = vshrl.u32 %v558, 16
      %v631 = vor.u32 %v629, %v627
      %v633 = vshll.u32 %v559, 16
      %v635 = vrot.slane %v633, 1
      %v636 = vsel %vm370, %v631, %v635
      %v637 = vshrl.u32 %v559, 16
      %v639 = vor.u32 %v637, %v635
      %v641 = vshll.u32 %v560, 16
      %v643 = vrot.slane %v641, 1
      %v644 = vsel %vm370, %v639, %v643
      %v645 = vshrl.u32 %v560, 16
      %v647 = vor.u32 %v645, %v643
      %v649 = vshll.u32 %v561, 16
      %v651 = vrot.slane %v649, 1
      %v652 = vsel %vm370, %v647, %v651
      %v653 = vshrl.u32 %v561, 16
      %v655 = vor.u32 %v653, %v651
      %v657 = vshll.u32 %v562, 16
      %v659 = vrot.slane %v657, 1
      %v660 = vsel %vm370, %v655, %v659
      %v661 = vshrl.u32 %v562, 16
      %v663 = vor.u32 %v661, %v659
      %v665 = vshll.u32 %v563, 16
      %v667 = vrot.slane %v665, 1
      %v668 = vsel %vm370, %v663, %v667
      %v669 = vshrl.u32 %v563, 16
      %v671 = vor.u32 %v669, %v667
      %v673 = vshll.u32 %v564, 16
      %v675 = vrot.slane %v673, 1
      %v676 = vsel %vm370, %v671, %v675
      %v677 = vshrl.u32 %v564, 16
      %v679 = vor.u32 %v677, %v675
      %v681 = vshll.u32 %v565, 16
      %v683 = vrot.slane %v681, 1
      %v684 = vsel %vm370, %v679, %v683
      %v685 = vshrl.u32 %v565, 16
      %v687 = vor.u32 %v685, %v683
      %v689 = vshll.u32 %v592, 16
      %v691 = vrot.slane %v689, 1
      %v692 = vsel %vm370, %v687, %v691
      %693 = vrot.lane.b32.xlu0 %v604, 16
      %v694 = vpop.permute.xlu0 %693
      %695 = vrot.lane.b32.xlu0 %v612, 16
      %v696 = vpop.permute.xlu0 %695
      %697 = vrot.lane.b32.xlu0 %v620, 16
      %v698 = vpop.permute.xlu0 %697
      %699 = vrot.lane.b32.xlu0 %v628, 16
      %v700 = vpop.permute.xlu0 %699
      %701 = vrot.lane.b32.xlu0 %v636, 16
      %v702 = vpop.permute.xlu0 %701
      %703 = vrot.lane.b32.xlu0 %v644, 16
      %v704 = vpop.permute.xlu0 %703
      %705 = vrot.lane.b32.xlu0 %v652, 16
      %v706 = vpop.permute.xlu0 %705
      %707 = vrot.lane.b32.xlu0 %v660, 16
      %v708 = vpop.permute.xlu0 %707
      %709 = vrot.lane.b32.xlu0 %v668, 16
      %v710 = vpop.permute.xlu0 %709
      %711 = vrot.lane.b32.xlu0 %v676, 16
      %v712 = vpop.permute.xlu0 %711
      %713 = vrot.lane.b32.xlu0 %v684, 16
      %v714 = vpop.permute.xlu0 %713
      %715 = vrot.lane.b32.xlu0 %v692, 16
      %v716 = vpop.permute.xlu0 %715
      %v718 = vunpack.c.l.b16 %v301
      %v719 = vpack.c.b16 %v335, %v718
      %v720 = vrot.slane %v719, 1
      %v721 = vrot.slane %v555, 1
      %v722 = vsel %vm498, %v720, %v721
      %v723 = vrot.slane %v556, 1
      %v724 = vsel %vm498, %v721, %v723
      %v725 = vrot.slane %v557, 1
      %v726 = vsel %vm498, %v723, %v725
      %v727 = vrot.slane %v558, 1
      %v728 = vsel %vm498, %v725, %v727
      %v729 = vrot.slane %v559, 1
      %v730 = vsel %vm498, %v727, %v729
      %v731 = vrot.slane %v560, 1
      %v732 = vsel %vm498, %v729, %v731
      %v733 = vrot.slane %v561, 1
      %v734 = vsel %vm498, %v731, %v733
      %v735 = vrot.slane %v562, 1
      %v736 = vsel %vm498, %v733, %v735
      %v737 = vrot.slane %v563, 1
      %v738 = vsel %vm498, %v735, %v737
      %v739 = vrot.slane %v564, 1
      %v740 = vsel %vm498, %v737, %v739
      %v741 = vrot.slane %v565, 1
      %v742 = vsel %vm498, %v739, %v741
      %v743 = vrot.slane %v592, 1
      %v744 = vsel %vm498, %v741, %v743
      %745 = vrot.lane.b32.xlu0 %v722, 20
      %v746 = vpop.permute.xlu0 %745
      %747 = vrot.lane.b32.xlu0 %v724, 20
      %v748 = vpop.permute.xlu0 %747
      %749 = vrot.lane.b32.xlu0 %v726, 20
      %v750 = vpop.permute.xlu0 %749
      %751 = vrot.lane.b32.xlu0 %v728, 20
      %v752 = vpop.permute.xlu0 %751
      %753 = vrot.lane.b32.xlu0 %v730, 20
      %v754 = vpop.permute.xlu0 %753
      %755 = vrot.lane.b32.xlu0 %v732, 20
      %v756 = vpop.permute.xlu0 %755
      %757 = vrot.lane.b32.xlu0 %v734, 20
      %v758 = vpop.permute.xlu0 %757
      %759 = vrot.lane.b32.xlu0 %v736, 20
      %v760 = vpop.permute.xlu0 %759
      %761 = vrot.lane.b32.xlu0 %v738, 20
      %v762 = vpop.permute.xlu0 %761
      %763 = vrot.lane.b32.xlu0 %v740, 20
      %v764 = vpop.permute.xlu0 %763
      %765 = vrot.lane.b32.xlu0 %v742, 20
      %v766 = vpop.permute.xlu0 %765
      %767 = vrot.lane.b32.xlu0 %v744, 20
      %v768 = vpop.permute.xlu0 %767
      %v772 = vunpack.c.l.b16 %v302
      %v773 = vunpack.c.l.b16 %v303
      %v774 = vunpack.c.l.b16 %v304
      %v775 = vpack.c.b16 %v552, %v551
      %v776 = vpack.c.b16 %v772, %v553
      %v777 = vpack.c.b16 %v774, %v773
      %778 = vrot.lane.b32.xlu0 %v358, 24
      %v779 = vpop.permute.xlu0 %778
      %780 = vrot.lane.b32.xlu0 %v359, 24
      %v781 = vpop.permute.xlu0 %780
      %782 = vrot.lane.b32.xlu0 %v360, 24
      %v783 = vpop.permute.xlu0 %782
      %784 = vrot.lane.b32.xlu0 %v361, 24
      %v785 = vpop.permute.xlu0 %784
      %786 = vrot.lane.b32.xlu0 %v362, 24
      %v787 = vpop.permute.xlu0 %786
      %788 = vrot.lane.b32.xlu0 %v363, 24
      %v789 = vpop.permute.xlu0 %788
      %790 = vrot.lane.b32.xlu0 %v364, 24
      %v791 = vpop.permute.xlu0 %790
      %792 = vrot.lane.b32.xlu0 %v365, 24
      %v793 = vpop.permute.xlu0 %792
      %794 = vrot.lane.b32.xlu0 %v366, 24
      %v795 = vpop.permute.xlu0 %794
      %796 = vrot.lane.b32.xlu0 %v775, 24
      %v797 = vpop.permute.xlu0 %796
      %798 = vrot.lane.b32.xlu0 %v776, 24
      %v799 = vpop.permute.xlu0 %798
      %800 = vrot.lane.b32.xlu0 %v777, 24
      %v801 = vpop.permute.xlu0 %800
      %v803 = vunpack.c.l.b16 %v305
      %v804 = vpack.c.b16 %v803, %v803
      %v806 = vshll.u32 %v775, 16
      %v808 = vrot.slane %v806, 1
      %v809 = vsel %vm370, %v465, %v808
      %v810 = vshrl.u32 %v775, 16
      %v812 = vor.u32 %v810, %v808
      %v814 = vshll.u32 %v776, 16
      %v816 = vrot.slane %v814, 1
      %v817 = vsel %vm370, %v812, %v816
      %v818 = vshrl.u32 %v776, 16
      %v820 = vor.u32 %v818, %v816
      %v822 = vshll.u32 %v777, 16
      %v824 = vrot.slane %v822, 1
      %v825 = vsel %vm370, %v820, %v824
      %v826 = vshrl.u32 %v777, 16
      %v828 = vor.u32 %v826, %v824
      %v830 = vshll.u32 %v804, 16
      %v832 = vrot.slane %v830, 1
      %v833 = vsel %vm370, %v828, %v832
      %834 = vrot.lane.b32.xlu0 %v406, 28
      %v835 = vpop.permute.xlu0 %834
      %836 = vrot.lane.b32.xlu0 %v414, 28
      %v837 = vpop.permute.xlu0 %836
      %838 = vrot.lane.b32.xlu0 %v422, 28
      %v839 = vpop.permute.xlu0 %838
      %840 = vrot.lane.b32.xlu0 %v430, 28
      %v841 = vpop.permute.xlu0 %840
      %842 = vrot.lane.b32.xlu0 %v438, 28
      %v843 = vpop.permute.xlu0 %842
      %844 = vrot.lane.b32.xlu0 %v446, 28
      %v845 = vpop.permute.xlu0 %844
      %846 = vrot.lane.b32.xlu0 %v454, 28
      %v847 = vpop.permute.xlu0 %846
      %848 = vrot.lane.b32.xlu0 %v462, 28
      %v849 = vpop.permute.xlu0 %848
      %850 = vrot.lane.b32.xlu0 %v809, 28
      %v851 = vpop.permute.xlu0 %850
      %852 = vrot.lane.b32.xlu0 %v817, 28
      %v853 = vpop.permute.xlu0 %852
      %854 = vrot.lane.b32.xlu0 %v825, 28
      %v855 = vpop.permute.xlu0 %854
      %856 = vrot.lane.b32.xlu0 %v833, 28
      %v857 = vpop.permute.xlu0 %856
      %v859 = vunpack.c.l.b16 %v306
      %v860 = vpack.c.b16 %v338, %v859
      %v861 = vrot.slane %v860, 1
      %v862 = vsel %vm498, %v861, %v506
      %v863 = vrot.slane %v775, 1
      %v864 = vsel %vm498, %v520, %v863
      %v865 = vrot.slane %v776, 1
      %v866 = vsel %vm498, %v863, %v865
      %v867 = vrot.slane %v777, 1
      %v868 = vsel %vm498, %v865, %v867
      %v869 = vrot.slane %v804, 1
      %v870 = vsel %vm498, %v867, %v869
      %871 = vrot.lane.b32.xlu0 %v862, 32
      %v872 = vpop.permute.xlu0 %871
      %873 = vrot.lane.b32.xlu0 %v509, 32
      %v874 = vpop.permute.xlu0 %873
      %875 = vrot.lane.b32.xlu0 %v511, 32
      %v876 = vpop.permute.xlu0 %875
      %877 = vrot.lane.b32.xlu0 %v513, 32
      %v878 = vpop.permute.xlu0 %877
      %879 = vrot.lane.b32.xlu0 %v515, 32
      %v880 = vpop.permute.xlu0 %879
      %881 = vrot.lane.b32.xlu0 %v517, 32
      %v882 = vpop.permute.xlu0 %881
      %883 = vrot.lane.b32.xlu0 %v519, 32
      %v884 = vpop.permute.xlu0 %883
      %885 = vrot.lane.b32.xlu0 %v521, 32
      %v886 = vpop.permute.xlu0 %885
      %887 = vrot.lane.b32.xlu0 %v864, 32
      %v888 = vpop.permute.xlu0 %887
      %889 = vrot.lane.b32.xlu0 %v866, 32
      %v890 = vpop.permute.xlu0 %889
      %891 = vrot.lane.b32.xlu0 %v868, 32
      %v892 = vpop.permute.xlu0 %891
      %893 = vrot.lane.b32.xlu0 %v870, 32
      %v894 = vpop.permute.xlu0 %893
      %vm895 = vcmask 31744
      %v897 = vsel %vm895, %v355, %v472
      %v899 = vsel %vm895, %v356, %v474
      %v901 = vsel %vm895, %v357, %v476
      %v903 = vsel %vm895, %v358, %v478
      %v905 = vsel %vm895, %v359, %v480
      %v907 = vsel %vm895, %v360, %v482
      %v909 = vsel %vm895, %v361, %v484
      %v911 = vsel %vm895, %v362, %v486
      %v913 = vsel %vm895, %v363, %v488
      %v915 = vsel %vm895, %v364, %v490
      %v917 = vsel %vm895, %v365, %v492
      %v919 = vsel %vm895, %v366, %v494
      %vm920 = vcmask 64512
      %v922 = vsel %vm920, %v897, %v525
      %v924 = vsel %vm920, %v899, %v527
      %v926 = vsel %vm920, %v901, %v529
      %v928 = vsel %vm920, %v903, %v531
      %v930 = vsel %vm920, %v905, %v533
      %v932 = vsel %vm920, %v907, %v535
      %v934 = vsel %vm920, %v909, %v537
      %v936 = vsel %vm920, %v911, %v539
      %v938 = vsel %vm920, %v913, %v541
      %v940 = vsel %vm920, %v915, %v543
      %v942 = vsel %vm920, %v917, %v545
      %v944 = vsel %vm920, %v919, %v547
      %vm945 = vcmask 97280
      %v947 = vsel %vm945, %v922, %v567
      %v949 = vsel %vm945, %v924, %v569
      %v951 = vsel %vm945, %v926, %v571
      %v953 = vsel %vm945, %v928, %v573
      %v955 = vsel %vm945, %v930, %v575
      %v957 = vsel %vm945, %v932, %v577
      %v959 = vsel %vm945, %v934, %v579
      %v961 = vsel %vm945, %v936, %v581
      %v963 = vsel %vm945, %v938, %v583
      %v965 = vsel %vm945, %v940, %v585
      %v967 = vsel %vm945, %v942, %v587
      %v969 = vsel %vm945, %v944, %v589
      %vm970 = vcmask 130048
      %v972 = vsel %vm970, %v947, %v694
      %v974 = vsel %vm970, %v949, %v696
      %v976 = vsel %vm970, %v951, %v698
      %v978 = vsel %vm970, %v953, %v700
      %v980 = vsel %vm970, %v955, %v702
      %v982 = vsel %vm970, %v957, %v704
      %v984 = vsel %vm970, %v959, %v706
      %v986 = vsel %vm970, %v961, %v708
      %v988 = vsel %vm970, %v963, %v710
      %v990 = vsel %vm970, %v965, %v712
      %v992 = vsel %vm970, %v967, %v714
      %v994 = vsel %vm970, %v969, %v716
      %vm995 = vcmask 162816
      %v997 = vsel %vm995, %v972, %v746
      %v999 = vsel %vm995, %v974, %v748
      %v1001 = vsel %vm995, %v976, %v750
      %v1003 = vsel %vm995, %v978, %v752
      %v1005 = vsel %vm995, %v980, %v754
      %v1007 = vsel %vm995, %v982, %v756
      %v1009 = vsel %vm995, %v984, %v758
      %v1011 = vsel %vm995, %v986, %v760
      %v1013 = vsel %vm995, %v988, %v762
      %v1015 = vsel %vm995, %v990, %v764
      %v1017 = vsel %vm995, %v992, %v766
      %v1019 = vsel %vm995, %v994, %v768
      %vm1020 = vcmask 195584
      %v1022 = vsel %vm1020, %v997, %v779
      %v1024 = vsel %vm1020, %v999, %v781
      %v1026 = vsel %vm1020, %v1001, %v783
      %v1028 = vsel %vm1020, %v1003, %v785
      %v1030 = vsel %vm1020, %v1005, %v787
      %v1032 = vsel %vm1020, %v1007, %v789
      %v1034 = vsel %vm1020, %v1009, %v791
      %v1036 = vsel %vm1020, %v1011, %v793
      %v1038 = vsel %vm1020, %v1013, %v795
      %v1040 = vsel %vm1020, %v1015, %v797
      %v1042 = vsel %vm1020, %v1017, %v799
      %v1044 = vsel %vm1020, %v1019, %v801
      %vm1045 = vcmask 228352
      %v1047 = vsel %vm1045, %v1022, %v835
      %v1049 = vsel %vm1045, %v1024, %v837
      %v1051 = vsel %vm1045, %v1026, %v839
      %v1053 = vsel %vm1045, %v1028, %v841
      %v1055 = vsel %vm1045, %v1030, %v843
      %v1057 = vsel %vm1045, %v1032, %v845
      %v1059 = vsel %vm1045, %v1034, %v847
      %v1061 = vsel %vm1045, %v1036, %v849
      %v1063 = vsel %vm1045, %v1038, %v851
      %v1065 = vsel %vm1045, %v1040, %v853
      %v1067 = vsel %vm1045, %v1042, %v855
      %v1069 = vsel %vm1045, %v1044, %v857
      %vm1070 = vcmask 261120
      %v1072 = vsel %vm1070, %v1047, %v872
      %v1074 = vsel %vm1070, %v1049, %v874
      %v1076 = vsel %vm1070, %v1051, %v876
      %v1078 = vsel %vm1070, %v1053, %v878
      %v1080 = vsel %vm1070, %v1055, %v880
      %v1082 = vsel %vm1070, %v1057, %v882
      %v1084 = vsel %vm1070, %v1059, %v884
      %v1086 = vsel %vm1070, %v1061, %v886
      %v1088 = vsel %vm1070, %v1063, %v888
      %v1090 = vsel %vm1070, %v1065, %v890
      %v1092 = vsel %vm1070, %v1067, %v892
      %v1094 = vsel %vm1070, %v1069, %v894
      %v1095 = vld [vmem:[%s1] sm:$0xf]
      %v1096 = vld [vmem:[%s1 + $0x4] sm:$0xf]
      %v1097 = vld [vmem:[%s1 + $0x8] sm:$0xf]
      %v1098 = vld [vmem:[%s1 + $0xc] sm:$0xf]
      %v1099 = vld [vmem:[%s1 + $0x10] sm:$0x3]
      %v1100 = vld [vmem:[%s251] sm:$0x1]
      %v1102 = vlaneseq
      %v1103 = vshrl.u32 %v1102, 7
      %v1104 = vsub.s32 0, %v1103
      %v1105 = vrot.slane %v1100, %v1104
      %v1112 = vunpack.c.l.b16 %v1095
      %v1113 = vunpack.c.l.b16 %v1096
      %v1114 = vunpack.c.l.b16 %v1097
      %v1115 = vunpack.c.l.b16 %v1098
      %v1116 = vunpack.c.l.b16 %v1099
      %v1117 = vpack.c.b16 %v1113, %v1112
      %v1118 = vpack.c.b16 %v1115, %v1114
      %v1119 = vpack.c.b16 %v1116, %v1116
      %vm1122 = vcmask 293888
      %v1123 = vsel %vm1122, %v1072, 0
      %v1125 = vsel %vm1122, %v1074, 0
      %v1127 = vsel %vm1122, %v1076, 0
      %v1129 = vsel %vm1122, %v1078, 0
      %v1131 = vsel %vm1122, %v1080, 0
      %v1133 = vsel %vm1122, %v1082, 0
      %v1135 = vsel %vm1122, %v1084, 0
      %v1137 = vsel %vm1122, %v1086, 0
      %v1139 = vsel %vm1122, %v1088, 0
      %v1141 = vsel %vm1122, %v1090, 0
      %v1143 = vsel %vm1122, %v1092, 0
      %v1145 = vsel %vm1122, %v1094, 0
      %vm1147 = vcmask 1041408
      %v1149 = vsel %vm1147, %v1119, 0
      %1151 = vmatprep.subr.bf16.mxu0 0
      %1152 = vmatpush1.bf16.msra.mxu0 0
      %1153 = vmatprep.subr.bf16.mxu0 0
      %1154 = vmatpush1.bf16.msra.mxu0 0
      %1155 = vmatprep.subr.bf16.mxu0 0
      %1156 = vmatpush1.bf16.msra.mxu0 0
      %1157 = vmatprep.subr.bf16.mxu0 0
      %1158 = vmatpush1.bf16.msra.mxu0 0
      %1159 = vmatprep.subr.bf16.mxu0 0
      %1160 = vmatpush1.bf16.msra.mxu0 0
      %1161 = vmatprep.subr.bf16.mxu0 0
      %1162 = vmatpush1.bf16.msra.mxu0 %v1149
      %1163 = vmatprep.subr.bf16.mxu0 0
      %1164 = vmatpush1.bf16.msra.mxu0 %v1118
      %1165 = vmatprep.subr.bf16.mxu0 0
      %1166 = vmatpush1.bf16.msra.mxu0 %v1117
      %1167 = vmatprep.subr.bf16.mxu0 0
      %1168 = vmatpush2.bf16.msra.mxu0 0
      %1169 = vmatprep.subr.bf16.mxu0 0
      %1170 = vmatpush2.bf16.msra.mxu0 0
      %1171 = vmatprep.subr.bf16.mxu0 0
      %1172 = vmatpush2.bf16.msra.mxu0 0
      %1173 = vmatprep.subr.bf16.mxu0 0
      %1174 = vmatpush2.bf16.msra.mxu0 0
      %1175 = vmatprep.subr.bf16.mxu0 0
      %1176 = vmatpush2.bf16.msra.mxu0 0
      %1177 = vmatprep.subr.bf16.mxu0 0
      %1178 = vmatpush2.bf16.msra.mxu0 0
      %1179 = vmatprep.subr.bf16.mxu0 0
      %1180 = vmatpush2.bf16.msra.mxu0 0
      %1181 = vmatprep.subr.bf16.mxu0 0
      %1182 = vmatpush2.bf16.msra.mxu0 0
      %1183 = vmatprep.mubr.bf16.mxu0 0
      %1184 = vmatmul.mubr.bf16.gmra.mxu0 %v1123
      %v1185 = vpop.f32.mrf.mxu0
      %v1186 = vadd.f32 %v1105, %v1185
      %v1187 = vpop.f32.mrf.mxu0
      %v1188 = vpop.f32.mrf.mxu0
      %v1189 = vadd.f32 %v1105, %v1188
      %v1190 = vpop.f32.mrf.mxu0
      %1191 = vmatprep.mubr.bf16.mxu0 0
      %1192 = vmatmul.mubr.bf16.gmra.mxu0 %v1125
      %v1193 = vpop.f32.mrf.mxu0
      %v1194 = vpop.f32.mrf.mxu0
      %v1195 = vpop.f32.mrf.mxu0
      %v1196 = vadd.f32 %v1105, %v1195
      %v1197 = vpop.f32.mrf.mxu0
      %1198 = vmatprep.mubr.bf16.mxu0 0
      %1199 = vmatmul.mubr.bf16.gmra.mxu0 %v1127
      %v1200 = vpop.f32.mrf.mxu0
      %v1201 = vadd.f32 %v1105, %v1200
      %v1202 = vpop.f32.mrf.mxu0
      %v1203 = vpop.f32.mrf.mxu0
      %v1204 = vpop.f32.mrf.mxu0
      %1205 = vmatprep.mubr.bf16.mxu0 0
      %1206 = vmatmul.mubr.bf16.gmra.mxu0 %v1129
      %v1207 = vpop.f32.mrf.mxu0
      %v1208 = vadd.f32 %v1105, %v1207
      %v1209 = vpop.f32.mrf.mxu0
      %v1210 = vpop.f32.mrf.mxu0
      %v1211 = vadd.f32 %v1105, %v1210
      %v1212 = vpop.f32.mrf.mxu0
      %1213 = vmatprep.mubr.bf16.mxu0 0
      %1214 = vmatmul.mubr.bf16.gmra.mxu0 %v1131
      %v1215 = vpop.f32.mrf.mxu0
      %v1216 = vpop.f32.mrf.mxu0
      %v1217 = vpop.f32.mrf.mxu0
      %v1218 = vadd.f32 %v1105, %v1217
      %v1219 = vpop.f32.mrf.mxu0
      %1220 = vmatprep.mubr.bf16.mxu0 0
      %1221 = vmatmul.mubr.bf16.gmra.mxu0 %v1133
      %v1222 = vpop.f32.mrf.mxu0
      %v1223 = vadd.f32 %v1105, %v1222
      %v1224 = vpop.f32.mrf.mxu0
      %v1225 = vpop.f32.mrf.mxu0
      %v1226 = vpop.f32.mrf.mxu0
      %1227 = vmatprep.mubr.bf16.mxu0 0
      %1228 = vmatmul.mubr.bf16.gmra.mxu0 %v1135
      %v1229 = vpop.f32.mrf.mxu0
      %v1230 = vadd.f32 %v1105, %v1229
      %v1231 = vpop.f32.mrf.mxu0
      %v1232 = vpop.f32.mrf.mxu0
      %v1233 = vadd.f32 %v1105, %v1232
      %v1234 = vpop.f32.mrf.mxu0
      %1235 = vmatprep.mubr.bf16.mxu0 0
      %1236 = vmatmul.mubr.bf16.gmra.mxu0 %v1137
      %v1237 = vpop.f32.mrf.mxu0
      %v1238 = vpop.f32.mrf.mxu0
      %v1239 = vpop.f32.mrf.mxu0
      %v1240 = vadd.f32 %v1105, %v1239
      %v1241 = vpop.f32.mrf.mxu0
      %1242 = vmatprep.mubr.bf16.mxu0 0
      %1243 = vmatmul.mubr.bf16.gmra.mxu0 %v1139
      %v1244 = vpop.f32.mrf.mxu0
      %v1245 = vadd.f32 %v1105, %v1244
      %v1246 = vpop.f32.mrf.mxu0
      %v1247 = vpop.f32.mrf.mxu0
      %v1248 = vpop.f32.mrf.mxu0
      %1249 = vmatprep.mubr.bf16.mxu0 0
      %1250 = vmatmul.mubr.bf16.gmra.mxu0 %v1141
      %v1251 = vpop.f32.mrf.mxu0
      %v1252 = vadd.f32 %v1105, %v1251
      %v1253 = vpop.f32.mrf.mxu0
      %v1254 = vpop.f32.mrf.mxu0
      %v1255 = vadd.f32 %v1105, %v1254
      %v1256 = vpop.f32.mrf.mxu0
      %1257 = vmatprep.mubr.bf16.mxu0 0
      %1258 = vmatmul.mubr.bf16.gmra.mxu0 %v1143
      %v1259 = vpop.f32.mrf.mxu0
      %v1260 = vpop.f32.mrf.mxu0
      %v1261 = vpop.f32.mrf.mxu0
      %v1262 = vadd.f32 %v1105, %v1261
      %v1263 = vpop.f32.mrf.mxu0
      %1264 = vmatprep.mubr.bf16.mxu0 0
      %1265 = vmatmul.mubr.bf16.gmra.mxu0 %v1145
      %v1266 = vpop.f32.mrf.mxu0
      %v1267 = vadd.f32 %v1105, %v1266
      %v1268 = vpop.f32.mrf.mxu0
      %v1269 = vpop.f32.mrf.mxu0
      %v1270 = vpop.f32.mrf.mxu0
      %1271 = vdwg.mxu0
      %1272 = vst [vmem:[%s260] sm:$0xff] %v1186
      %1273 = vst [vmem:[%s260 + $0x8] sm:$0xff] %v1189
      %1274 = vst [vmem:[%s260 + $0x10] sm:$0xff] %v1196
      %1275 = vst [vmem:[%s260 + $0x18] sm:$0xff] %v1201
      %1276 = vst [vmem:[%s260 + $0x20] sm:$0xff] %v1208
      %1277 = vst [vmem:[%s260 + $0x28] sm:$0xff] %v1211
      %1278 = vst [vmem:[%s260 + $0x30] sm:$0xff] %v1218
      %1279 = vst [vmem:[%s260 + $0x38] sm:$0xff] %v1223
      %1280 = vst [vmem:[%s260 + $0x40] sm:$0xff] %v1230
      %1281 = vst [vmem:[%s260 + $0x48] sm:$0xff] %v1233
      %1282 = vst [vmem:[%s260 + $0x50] sm:$0xff] %v1240
      %1283 = vst [vmem:[%s260 + $0x58] sm:$0xff] %v1245
      %1284 = vst [vmem:[%s260 + $0x60] sm:$0xff] %v1252
      %1285 = vst [vmem:[%s260 + $0x68] sm:$0xff] %v1255
      %1286 = vst [vmem:[%s260 + $0x70] sm:$0xff] %v1262
      %1287 = vst [vmem:[%s260 + $0x78] sm:$0xff] %v1267
      %v1288 = vadd.f32 %v1186, %v1189
      %v1289 = vadd.f32 %v1288, %v1196
      %v1290 = vadd.f32 %v1289, %v1201
      %v1291 = vadd.f32 %v1290, %v1208
      %v1292 = vadd.f32 %v1291, %v1211
      %v1293 = vadd.f32 %v1292, %v1218
      %v1294 = vadd.f32 %v1293, %v1223
      %v1295 = vadd.f32 %v1294, %v1230
      %v1296 = vadd.f32 %v1295, %v1233
      %v1297 = vadd.f32 %v1296, %v1240
      %v1298 = vadd.f32 %v1297, %v1245
      %v1299 = vadd.f32 %v1298, %v1252
      %v1300 = vadd.f32 %v1299, %v1255
      %v1301 = vadd.f32 %v1300, %v1262
      %v1302 = vadd.f32 %v1301, %v1267
      %v1303 = vrot.slane %v1302, 4
      %v1304 = vadd.f32 %v1302, %v1303
      %v1305 = vrot.slane %v1304, 2
      %v1306 = vadd.f32 %v1304, %v1305
      %v1307 = vrot.slane %v1306, 1
      %v1308 = vadd.f32 %v1306, %v1307
      %v1309 = vmul.f32 %v1186, %v1186
      %v1310 = vmul.f32 %v1189, %v1189
      %v1311 = vmul.f32 %v1196, %v1196
      %v1312 = vmul.f32 %v1201, %v1201
      %v1313 = vmul.f32 %v1208, %v1208
      %v1314 = vmul.f32 %v1211, %v1211
      %v1315 = vmul.f32 %v1218, %v1218
      %v1316 = vmul.f32 %v1223, %v1223
      %v1317 = vmul.f32 %v1230, %v1230
      %v1318 = vmul.f32 %v1233, %v1233
      %v1319 = vmul.f32 %v1240, %v1240
      %v1320 = vmul.f32 %v1245, %v1245
      %v1321 = vmul.f32 %v1252, %v1252
      %v1322 = vmul.f32 %v1255, %v1255
      %v1323 = vmul.f32 %v1262, %v1262
      %v1324 = vmul.f32 %v1267, %v1267
      %v1325 = vadd.f32 %v1309, %v1310
      %v1326 = vadd.f32 %v1325, %v1311
      %v1327 = vadd.f32 %v1326, %v1312
      %v1328 = vadd.f32 %v1327, %v1313
      %v1329 = vadd.f32 %v1328, %v1314
      %v1330 = vadd.f32 %v1329, %v1315
      %v1331 = vadd.f32 %v1330, %v1316
      %v1332 = vadd.f32 %v1331, %v1317
      %v1333 = vadd.f32 %v1332, %v1318
      %v1334 = vadd.f32 %v1333, %v1319
      %v1335 = vadd.f32 %v1334, %v1320
      %v1336 = vadd.f32 %v1335, %v1321
      %v1337 = vadd.f32 %v1336, %v1322
      %v1338 = vadd.f32 %v1337, %v1323
      %v1339 = vadd.f32 %v1338, %v1324
      %v1340 = vrot.slane %v1339, 4
      %v1341 = vadd.f32 %v1339, %v1340
      %v1342 = vrot.slane %v1341, 2
      %v1343 = vadd.f32 %v1341, %v1342
      %v1344 = vrot.slane %v1343, 1
      %v1345 = vadd.f32 %v1343, %v1344
      %vm1346 = vcmask 1040384
      %v1347 = vsel %vm1346, %v1308, %v1345
      %1348 = vst [vmem:[%s269] sm:$0x3] %v1347
      %s1349 = smul.u32 16, %s21
      %p1350 = scmp.lt.s32.totalorder %s20, 1
      %s1351 = scalar_select %p1350, %s20, 1
      %p1352 = scmp.lt.s32.totalorder %s1349, 31
      %s1353 = scalar_select %p1352, %s1349, 31
      %s1354 = smul.addr %s1351, 32
      %s1355 = sadd.s32 %s1353, %s1354
      %s1356 = smul.addr %s1355, 8
      %s1357 = scalar_lea.vmem %s3, %s1356
      %p1358 = scmp.lt.s32.totalorder %s20, 1
      %s1359 = scalar_select %p1358, %s20, 1
      %p1360 = scmp.lt.s32.totalorder %s21, 1
      %s1361 = scalar_select %p1360, %s21, 1
      %s1362 = smul.addr %s1359, 2
      %s1363 = sadd.s32 %s1361, %s1362
      %s1364 = smul.addr %s1363, 2
      %s1365 = scalar_lea.vmem %s4, %s1364
      // Predicated region
      $region33: #{residual_block.2} parent=31 // pred_check
        %p1366 = pneg %p123
      $region34: #{residual_block.2} parent=31 // pred_check_branch
        %1368 = sbr.rel (%p1366) target = $region36
      $region35: #{residual_block.2} parent=31 // pred_region
        %s1369 = smul.u32 16, %s21
      $region36: #{residual_block.2} parent=31 // pred_fallthru
        _
      // Predicated region
      $region37: #{residual_block.2} parent=31 // pred_check
        %p1370 = pneg %p151
      $region38: #{residual_block.2} parent=31 // pred_check_branch
        %1372 = sbr.rel (%p1370) target = $region40
      $region39: #{residual_block.2} parent=31 // pred_region
        _
      $region40: #{residual_block.2} parent=31 // pred_fallthru
        _
    $region32: #{residual_block.2} parent=5 // pred_fallthru
      _
    %p1373 = scmp.le.s32.totalorder 2, %s11
    // Predicated region
    $region41: #{residual_block.2} parent=5 // pred_check
      %p1374 = pneg %p1373
    $region42: #{residual_block.2} parent=5 // pred_check_branch
      %1376 = sbr.rel (%p1374) target = $region44
    $region43: #{residual_block.2} parent=5 // pred_region
      %s1377 = ssub.s32 %s11, 2
      // Predicated region
      $region45: #{residual_block.2} parent=43 // pred_check
        %p1378 = pneg %p129
      $region46: #{residual_block.2} parent=43 // pred_check_branch
        %1380 = sbr.rel (%p1378) target = $region48
      $region47: #{residual_block.2} parent=43 // pred_region
        %s1381 = smul.u32 16, %s23
        %p1382 = scmp.lt.s32.totalorder %s22, 1
        %s1383 = scalar_select %p1382, %s22, 1
        %p1384 = scmp.lt.s32.totalorder %s1381, 31
        %s1385 = scalar_select %p1384, %s1381, 31
        %s1386 = smul.addr %s1383, 32
        %s1387 = sadd.s32 %s1385, %s1386
        %s1388 = smul.addr %s1387, 8
        %s1389 = scalar_lea.vmem %s3, %s1388
      $region48: #{residual_block.2} parent=43 // pred_fallthru
        _
      // Predicated region
      $region49: #{residual_block.2} parent=43 // pred_check
        %p1390 = pneg %p157
      $region50: #{residual_block.2} parent=43 // pred_check_branch
        %1392 = sbr.rel (%p1390) target = $region52
      $region51: #{residual_block.2} parent=43 // pred_region
        %p1393 = scmp.lt.s32.totalorder %s22, 1
        %s1394 = scalar_select %p1393, %s22, 1
        %p1395 = scmp.lt.s32.totalorder %s23, 1
        %s1396 = scalar_select %p1395, %s23, 1
        %s1397 = smul.addr %s1394, 2
        %s1398 = sadd.s32 %s1396, %s1397
        %s1399 = smul.addr %s1398, 2
        %s1400 = scalar_lea.vmem %s4, %s1399
      $region52: #{residual_block.2} parent=43 // pred_fallthru
        _
    $region44: #{residual_block.2} parent=5 // pred_fallthru
      _
  $region6: #{residual_block.2} parent=0 // loop_footer
    %s15 = sadd.s32 1, %s11
  $region7: #{residual_block.2} parent=0 // loop_footer_branch
    %10 = sbr.rel target = $region3
  $region8: #{residual_block.2} parent=0 // loop_exit
    _

</llo_original>
